<compile_context>
chip_gen: v5e
topology: v5e:2x2
jax: 0.10.0
libtpu: 0.0.40
codegen_flags: <defaults>
</compile_context>

<pallas_src>
import functools
import math

import numpy as np
import jax
import jax.numpy as jnp
from jax.experimental import pallas as pl
from jax.experimental.pallas import tpu as pltpu  # noqa: F401  (kept for CompilerParams if needed)

# ----------------------- model config (small DeiT) -----------------------
BATCH = 2
IN_CH = 3
IMG = 16
PATCH = 4
NUM_PATCHES = (IMG // PATCH) * (IMG // PATCH)   # 16
HIDDEN = 32
NUM_HEADS = 4
HEAD_DIM = HIDDEN // NUM_HEADS                  # 8
DEPTH = 2
MLP_HIDDEN = 4 * HIDDEN                         # 128
NUM_CLASSES = 10
SEQ = NUM_PATCHES + 1                           # cls token + patches = 17
ROWS = BATCH * SEQ                              # 34 (batches packed contiguously)
BS = 40                                         # ROWS padded to a multiple of 8 sublanes
KROWS = NUM_HEADS * BS                          # 160 (heads packed along the key axis)
QKV_PAD = 128                                   # q/k/v each in a 128-lane-aligned block
CLS_PAD = 8                                     # cls-row tile rows (>= BATCH, one vreg)
HEAD_PAD = 128                                  # lane-dense classifier output width
CPP = IN_CH * PATCH * PATCH                     # 48
LN_EPS = 1e-6
NEG_INF = -1e30
EXACT_GELU = False   # True -> erf GELU (bitwise torch parity); False -> tanh approx (EUP slot)


# ----------------------------- fused Pallas kernel -----------------------------
def _deit_fused_kernel(
    patches_ref,            # [BS, CPP]          f32 (cls/pad rows are zero)
    base_ref,               # [BS, D]            f32 (cls+pos / pos+patch_bias / zeros)
    attn_bias_ref,          # [BS, H*BS]         f32 additive mask (0 or -1e30)
    hmask_ref,              # [H*BS, D]          f32 per-head column masks, stacked by head
    cls_sel_ref,            # [CLS_PAD, BS]      f32 cls-row selection matrix
    patch_w_ref,            # [CPP, D]           bf16
    ln1_g_ref, ln1_b_ref,   # [L, 1, D]          f32
    qkv_w_ref, qkv_b_ref,   # [L, D, 3*128] bf16 / [L, 1, 3*128] f32 (q pre-scaled, aligned)
    proj_w_ref, proj_b_ref, # [L, D, D] bf16 / [L, 1, D] f32
    ln2_g_ref, ln2_b_ref,   # [L, 1, D]          f32
    fc1_w_ref, fc1_b_ref,   # [L, D, MLP] bf16 / [L, 1, MLP] f32
    fc2_w_ref, fc2_b_ref,   # [L, MLP, D] bf16 / [L, 1, D] f32
    norm_g_ref, norm_b_ref, # [1, D]             f32
    head_w_ref, head_b_ref, # [D, HEAD_PAD] bf16 / [1, HEAD_PAD] f32
    out_ref,                # [CLS_PAD, HEAD_PAD] f32
    *, depth,
):
    f32 = jnp.float32
    bf16 = jnp.bfloat16

    def ln(x, g, b):
        mu = jnp.mean(x, axis=-1, keepdims=True)
        var = jnp.mean(jnp.square(x - mu), axis=-1, keepdims=True)
        return (x - mu) * jax.lax.rsqrt(var + LN_EPS) * g + b

    def gelu(x):
        if EXACT_GELU:
            return 0.5 * x * (1.0 + jax.lax.erf(x * (1.0 / math.sqrt(2.0))))
        c = math.sqrt(2.0 / math.pi)   # tanh approximation -> EUP transcendental slot
        return 0.5 * x * (1.0 + jnp.tanh(c * (x + 0.044715 * x * x * x)))

    def mm(a, b):                      # f32 activation x bf16 weight -> f32 accumulate
        return jnp.dot(a.astype(bf16), b, preferred_element_type=f32)

    def mm_t(a, b):                    # a @ b^T, bf16 operands, contract last dims
        return jax.lax.dot_general(a.astype(bf16), b, (((1,), (1,)), ((), ())),
                                   preferred_element_type=f32)

    hmask = hmask_ref[...]                                   # [H*BS, D] f32
    hmask_bf = hmask.astype(bf16)
    attn_bias = attn_bias_ref[...]                           # [BS, H*BS]

    # ---- patch embedding + cls/pos (base already carries cls token, pos embed, patch bias) ----
    x = mm(patches_ref[...], patch_w_ref[...]) + base_ref[...]            # [BS, D] f32

    for l in range(depth):
        # ---------------- attention ----------------
        h1 = ln(x, ln1_g_ref[l], ln1_b_ref[l])
        # single fused QKV matmul; q/k/v sit in 128-lane-aligned column blocks -> cheap slices
        qkv = mm(h1, qkv_w_ref[l]) + qkv_b_ref[l]                          # [BS, 3*128]
        q = qkv[:, 0:HIDDEN]                                               # 1/sqrt(Dh) pre-folded
        k = qkv[:, QKV_PAD:QKV_PAD + HIDDEN]
        v = qkv[:, 2 * QKV_PAD:2 * QKV_PAD + HIDDEN]

        # pack the 4 heads along the key axis: rows h*BS:(h+1)*BS hold head h's masked K/V
        k_stk = (jnp.concatenate([k] * NUM_HEADS, axis=0) * hmask).astype(bf16)   # [H*BS, D]
        v_stk = (jnp.concatenate([v] * NUM_HEADS, axis=0) * hmask).astype(bf16)

        s = mm_t(q, k_stk) + attn_bias                                     # [BS, H*BS]
        s = s - jnp.max(s, axis=-1, keepdims=True)       # global row max: exact per head segment
        p = jnp.exp(s)                                   # masked keys -> exp(-1e30 - m) = 0
        pb = p.astype(bf16)
        # per-head softmax denominators broadcast to that head's columns: P @ head_mask
        denom = jnp.dot(pb, hmask_bf, preferred_element_type=f32)          # [BS, D]
        attn = jnp.dot(pb, v_stk, preferred_element_type=f32)              # [BS, D]
        attn = attn * pl.reciprocal(denom, approx=True)

        x = x + mm(attn, proj_w_ref[l]) + proj_b_ref[l]

        # ---------------- MLP ----------------
        h2 = ln(x, ln2_g_ref[l], ln2_b_ref[l])
        h2 = gelu(mm(h2, fc1_w_ref[l]) + fc1_b_ref[l])
        x = x + mm(h2, fc2_w_ref[l]) + fc2_b_ref[l]

    # ---- epilogue on cls rows only: exact f32 selection matmul, final LN, classifier ----
    cls_x = jnp.dot(cls_sel_ref[...], x, preferred_element_type=f32)       # [CLS_PAD, D]
    xn = ln(cls_x, norm_g_ref[...], norm_b_ref[...])
    out_ref[...] = (mm(xn, head_w_ref[...]) + head_b_ref[...]).astype(out_ref.dtype)


def _whole_spec(shape):
    zeros = (0,) * len(shape)
    return pl.BlockSpec(shape, lambda *_: zeros)


# ----------------------------- one-time parameter packing -----------------------------
def pack_params(params):
    """Host-side packing of weights/constants, hoisted out of the per-call jitted path."""
    f32 = jnp.float32
    bf16 = jnp.bfloat16
    scale = HEAD_DIM ** -0.5
    blocks = params["blocks"]

    def stk(fn):
        return jnp.stack([fn(b) for b in blocks]).astype(f32)

    # fused QKV projection: q (scaled) / k / v each padded to a 128-lane-aligned column block
    wq = stk(lambda b: b["qkv_w"][:, 0:HIDDEN]) * scale
    wk = stk(lambda b: b["qkv_w"][:, HIDDEN:2 * HIDDEN])
    wv = stk(lambda b: b["qkv_w"][:, 2 * HIDDEN:3 * HIDDEN])
    bq = stk(lambda b: b["qkv_b"][0:HIDDEN].reshape(1, HIDDEN)) * scale
    bk = stk(lambda b: b["qkv_b"][HIDDEN:2 * HIDDEN].reshape(1, HIDDEN))
    bv = stk(lambda b: b["qkv_b"][2 * HIDDEN:3 * HIDDEN].reshape(1, HIDDEN))

    def padc(a):
        return jnp.pad(a, ((0, 0), (0, 0), (0, QKV_PAD - HIDDEN)))

    qkv_w = jnp.concatenate([padc(wq), padc(wk), padc(wv)], axis=-1).astype(bf16)  # [L,D,384]
    qkv_b = jnp.concatenate([padc(bq), padc(bk), padc(bv)], axis=-1)               # [L,1,384]

    ln1_g = stk(lambda b: b["ln1_g"].reshape(1, HIDDEN))
    ln1_b = stk(lambda b: b["ln1_b"].reshape(1, HIDDEN))
    ln2_g = stk(lambda b: b["ln2_g"].reshape(1, HIDDEN))
    ln2_b = stk(lambda b: b["ln2_b"].reshape(1, HIDDEN))
    proj_w = stk(lambda b: b["proj_w"]).astype(bf16)
    proj_b = stk(lambda b: b["proj_b"].reshape(1, HIDDEN))
    fc1_w = stk(lambda b: b["fc1_w"]).astype(bf16)
    fc1_b = stk(lambda b: b["fc1_b"].reshape(1, MLP_HIDDEN))
    fc2_w = stk(lambda b: b["fc2_w"]).astype(bf16)
    fc2_b = stk(lambda b: b["fc2_b"].reshape(1, HIDDEN))

    norm_g = params["norm_g"].reshape(1, HIDDEN).astype(f32)
    norm_b = params["norm_b"].reshape(1, HIDDEN).astype(f32)
    patch_w = params["patch_w"].astype(bf16)

    # lane-dense (128-wide) classifier head; host slices the first NUM_CLASSES columns
    head_w = jnp.zeros((HIDDEN, HEAD_PAD), f32).at[:, :NUM_CLASSES].set(
        params["head_w"].astype(f32)).astype(bf16)
    head_b = jnp.zeros((1, HEAD_PAD), f32).at[0, :NUM_CLASSES].set(
        params["head_b"].astype(f32))

    # per-row additive base: cls row -> cls_token + pos[0]; patch rows -> pos[i] + patch bias
    pos = params["pos_embed"][0].astype(f32)                      # [SEQ, D]
    cls = params["cls_token"].reshape(1, HIDDEN).astype(f32)
    base1 = jnp.concatenate(
        [cls + pos[0:1], pos[1:SEQ] + params["patch_b"][None, :].astype(f32)], axis=0)
    base = jnp.concatenate([base1] * BATCH, axis=0)               # [B*SEQ, D]
    base = jnp.pad(base, ((0, BS - ROWS), (0, 0)))                # [BS, D]

    # additive attention bias over the head-packed key axis: [BS, NUM_HEADS*BS].
    # Padded query rows are assigned to the last batch so their softmax denominator stays > 0.
    q_row = np.arange(BS)
    q_batch = np.minimum(q_row // SEQ, BATCH - 1)
    k_row = np.arange(KROWS) % BS
    k_valid = k_row < ROWS
    k_batch = np.minimum(k_row // SEQ, BATCH - 1)
    ok = k_valid[None, :] & (k_batch[None, :] == q_batch[:, None])
    attn_bias = jnp.asarray(np.where(ok, 0.0, NEG_INF), dtype=f32)

    # head-column masks stacked by head: row h*BS+j selects head h's 8 columns
    col_head = np.arange(HIDDEN) // HEAD_DIM
    row_head = np.arange(KROWS) // BS
    hmask = jnp.asarray((row_head[:, None] == col_head[None, :]).astype(np.float32))

    # cls-row selection matrix (rows 0..BATCH-1 pick each batch's cls row; rest zero)
    sel = np.zeros((CLS_PAD, BS), np.float32)
    for b in range(BATCH):
        sel[b, b * SEQ] = 1.0
    cls_sel = jnp.asarray(sel)

    return (base, attn_bias, hmask, cls_sel, patch_w,
            ln1_g, ln1_b, qkv_w, qkv_b, proj_w, proj_b, ln2_g, ln2_b,
            fc1_w, fc1_b, fc2_w, fc2_b, norm_g, norm_b, head_w, head_b)


# ----------------------------- forward pass -----------------------------
def deit_forward(x, packed):
    """x: [B, C, H, W] (NCHW)  ->  logits [B, NUM_CLASSES]"""
    B, C, H, W = x.shape
    assert B == BATCH and C == IN_CH and H == IMG and W == IMG
    Hp, Wp = H // PATCH, W // PATCH
    f32 = jnp.float32

    # patch extraction ((c, kh, kw) inner order, matching timm PatchEmbed Conv2d flattening);
    # batches packed contiguously along rows with a zero cls-slot row per batch, pad to BS rows
    patches = x.reshape(B, C, Hp, PATCH, Wp, PATCH).transpose(0, 2, 4, 1, 3, 5)
    patches = patches.reshape(B, Hp * Wp, CPP)
    patches = jnp.pad(patches, ((0, 0), (1, 0), (0, 0))).reshape(B * SEQ, CPP)
    patches = jnp.pad(patches, ((0, BS - B * SEQ), (0, 0))).astype(f32)

    args = (patches,) + tuple(packed)
    kernel = functools.partial(_deit_fused_kernel, depth=DEPTH)
    out = pl.pallas_call(
        kernel,
        out_shape=jax.ShapeDtypeStruct((CLS_PAD, HEAD_PAD), f32),
        in_specs=[_whole_spec(a.shape) for a in args],
        out_specs=_whole_spec((CLS_PAD, HEAD_PAD)),
    )(*args)

    return out[:B, :NUM_CLASSES]


# ----------------------------- params -----------------------------
def init_params(key):
    keys = iter(jax.random.split(key, 8 + DEPTH * 16))

    def nrm(shape, std=0.02):
        return (std * jax.random.normal(next(keys), shape)).astype(jnp.float32)

    params = {
        "patch_w": nrm((IN_CH * PATCH * PATCH, HIDDEN)),
        "patch_b": jnp.zeros((HIDDEN,), jnp.float32),
        "cls_token": nrm((1, 1, HIDDEN)),
        "pos_embed": nrm((1, SEQ, HIDDEN)),
        "norm_g": jnp.ones((HIDDEN,), jnp.float32),
        "norm_b": jnp.zeros((HIDDEN,), jnp.float32),
        "head_w": nrm((HIDDEN, NUM_CLASSES)),
        "head_b": jnp.zeros((NUM_CLASSES,), jnp.float32),
        "blocks": [],
    }
    for _ in range(DEPTH):
        params["blocks"].append({
            "ln1_g": jnp.ones((HIDDEN,), jnp.float32),
            "ln1_b": jnp.zeros((HIDDEN,), jnp.float32),
            "qkv_w": nrm((HIDDEN, 3 * HIDDEN)),
            "qkv_b": jnp.zeros((3 * HIDDEN,), jnp.float32),
            "proj_w": nrm((HIDDEN, HIDDEN)),
            "proj_b": jnp.zeros((HIDDEN,), jnp.float32),
            "ln2_g": jnp.ones((HIDDEN,), jnp.float32),
            "ln2_b": jnp.zeros((HIDDEN,), jnp.float32),
            "fc1_w": nrm((HIDDEN, MLP_HIDDEN)),
            "fc1_b": jnp.zeros((MLP_HIDDEN,), jnp.float32),
            "fc2_w": nrm((MLP_HIDDEN, HIDDEN)),
            "fc2_b": jnp.zeros((HIDDEN,), jnp.float32),
        })
    return params


if __name__ == "__main__":
    key = jax.random.PRNGKey(0)
    k_x, k_p = jax.random.split(key)
    x = jax.random.normal(k_x, (BATCH, IN_CH, IMG, IMG), dtype=jnp.float32)
    params = init_params(k_p)

    packed = pack_params(params)             # one-time packing, outside the jitted path
    fwd = jax.jit(deit_forward)
    logits = jax.block_until_ready(fwd(x, packed))

    assert logits.shape == (BATCH, NUM_CLASSES)
    assert bool(jnp.all(jnp.isfinite(logits)))
    print("KERNEL_OK")
</pallas_src>

<mosaic_0001>
module attributes {stable_mosaic.version = 11 : i64} {
  func.func @_deit_fused_kernel(%arg0: memref<40x48xf32, #tpu.memory_space<vmem>>, %arg1: memref<40x32xf32, #tpu.memory_space<vmem>>, %arg2: memref<40x160xf32, #tpu.memory_space<vmem>>, %arg3: memref<160x32xf32, #tpu.memory_space<vmem>>, %arg4: memref<8x40xf32, #tpu.memory_space<vmem>>, %arg5: memref<48x32xbf16, #tpu.memory_space<vmem>>, %arg6: memref<2x1x32xf32, #tpu.memory_space<vmem>>, %arg7: memref<2x1x32xf32, #tpu.memory_space<vmem>>, %arg8: memref<2x32x384xbf16, #tpu.memory_space<vmem>>, %arg9: memref<2x1x384xf32, #tpu.memory_space<vmem>>, %arg10: memref<2x32x32xbf16, #tpu.memory_space<vmem>>, %arg11: memref<2x1x32xf32, #tpu.memory_space<vmem>>, %arg12: memref<2x1x32xf32, #tpu.memory_space<vmem>>, %arg13: memref<2x1x32xf32, #tpu.memory_space<vmem>>, %arg14: memref<2x32x128xbf16, #tpu.memory_space<vmem>>, %arg15: memref<2x1x128xf32, #tpu.memory_space<vmem>>, %arg16: memref<2x128x32xbf16, #tpu.memory_space<vmem>>, %arg17: memref<2x1x32xf32, #tpu.memory_space<vmem>>, %arg18: memref<1x32xf32, #tpu.memory_space<vmem>>, %arg19: memref<1x32xf32, #tpu.memory_space<vmem>>, %arg20: memref<32x128xbf16, #tpu.memory_space<vmem>>, %arg21: memref<1x128xf32, #tpu.memory_space<vmem>>, %arg22: memref<8x128xf32, #tpu.memory_space<vmem>>) attributes {dimension_semantics = [], scalar_prefetch = 0 : i64, scratch_operands = 0 : i64, tpu.core_type = #tpu.core_type<tc>} {
    %c0 = arith.constant 0 : index
    %c0_0 = arith.constant 0 : index
    %0 = vector.load %arg3[%c0, %c0_0] : memref<160x32xf32, #tpu.memory_space<vmem>>, vector<160x32xf32>
    %1 = arith.truncf %0 : vector<160x32xf32> to vector<160x32xbf16>
    %c0_1 = arith.constant 0 : index
    %c0_2 = arith.constant 0 : index
    %2 = vector.load %arg2[%c0_1, %c0_2] : memref<40x160xf32, #tpu.memory_space<vmem>>, vector<40x160xf32>
    %c0_3 = arith.constant 0 : index
    %c0_4 = arith.constant 0 : index
    %3 = vector.load %arg0[%c0_3, %c0_4] : memref<40x48xf32, #tpu.memory_space<vmem>>, vector<40x48xf32>
    %c0_5 = arith.constant 0 : index
    %c0_6 = arith.constant 0 : index
    %4 = vector.load %arg5[%c0_5, %c0_6] : memref<48x32xbf16, #tpu.memory_space<vmem>>, vector<48x32xbf16>
    %5 = arith.truncf %3 : vector<40x48xf32> to vector<40x48xbf16>
    %cst = arith.constant dense<0.000000e+00> : vector<40x32xf32>
    %6 = tpu.matmul %5, %4, %cst {dimension_numbers = #tpu.dot_dimension_numbers<[1], [0], [0], [1], [0, 0, 1, 1], [], []>} : vector<40x48xbf16>, vector<48x32xbf16>, vector<40x32xf32> -> vector<40x32xf32>
    %c0_7 = arith.constant 0 : index
    %c0_8 = arith.constant 0 : index
    %7 = vector.load %arg1[%c0_7, %c0_8] : memref<40x32xf32, #tpu.memory_space<vmem>>, vector<40x32xf32>
    %8 = arith.addf %6, %7 : vector<40x32xf32>
    %c0_9 = arith.constant 0 : index
    %c0_10 = arith.constant 0 : index
    %c0_11 = arith.constant 0 : index
    %9 = vector.load %arg6[%c0_9, %c0_10, %c0_11] : memref<2x1x32xf32, #tpu.memory_space<vmem>>, vector<1x1x32xf32>
    %10 = vector.shape_cast %9 : vector<1x1x32xf32> to vector<1x32xf32>
    %c0_12 = arith.constant 0 : index
    %c0_13 = arith.constant 0 : index
    %c0_14 = arith.constant 0 : index
    %11 = vector.load %arg7[%c0_12, %c0_13, %c0_14] : memref<2x1x32xf32, #tpu.memory_space<vmem>>, vector<1x1x32xf32>
    %12 = vector.shape_cast %11 : vector<1x1x32xf32> to vector<1x32xf32>
    %cst_15 = arith.constant dense<0.000000e+00> : vector<40xf32>
    %13 = vector.multi_reduction <add>, %8, %cst_15 [1] : vector<40x32xf32> to vector<40xf32>
    %14 = vector.shape_cast %13 : vector<40xf32> to vector<40x1xf32>
    %cst_16 = arith.constant 3.200000e+01 : f32
    %15 = vector.broadcast %cst_16 : f32 to vector<40x1xf32>
    %16 = arith.divf %14, %15 : vector<40x1xf32>
    %17 = vector.broadcast %16 : vector<40x1xf32> to vector<40x32xf32>
    %18 = arith.subf %8, %17 : vector<40x32xf32>
    %19 = arith.mulf %18, %18 : vector<40x32xf32>
    %cst_17 = arith.constant dense<0.000000e+00> : vector<40xf32>
    %20 = vector.multi_reduction <add>, %19, %cst_17 [1] : vector<40x32xf32> to vector<40xf32>
    %21 = vector.shape_cast %20 : vector<40xf32> to vector<40x1xf32>
    %cst_18 = arith.constant 3.200000e+01 : f32
    %22 = vector.broadcast %cst_18 : f32 to vector<40x1xf32>
    %23 = arith.divf %21, %22 : vector<40x1xf32>
    %24 = vector.broadcast %16 : vector<40x1xf32> to vector<40x32xf32>
    %25 = arith.subf %8, %24 : vector<40x32xf32>
    %cst_19 = arith.constant 9.99999997E-7 : f32
    %26 = vector.broadcast %cst_19 : f32 to vector<40x1xf32>
    %27 = arith.addf %23, %26 : vector<40x1xf32>
    %28 = math.rsqrt %27 : vector<40x1xf32>
    %29 = vector.broadcast %28 : vector<40x1xf32> to vector<40x32xf32>
    %30 = arith.mulf %25, %29 : vector<40x32xf32>
    %31 = vector.broadcast %10 : vector<1x32xf32> to vector<40x32xf32>
    %32 = arith.mulf %30, %31 : vector<40x32xf32>
    %33 = vector.broadcast %12 : vector<1x32xf32> to vector<40x32xf32>
    %34 = arith.addf %32, %33 : vector<40x32xf32>
    %c0_20 = arith.constant 0 : index
    %c0_21 = arith.constant 0 : index
    %c0_22 = arith.constant 0 : index
    %35 = vector.load %arg8[%c0_20, %c0_21, %c0_22] : memref<2x32x384xbf16, #tpu.memory_space<vmem>>, vector<1x32x384xbf16>
    %36 = vector.shape_cast %35 : vector<1x32x384xbf16> to vector<32x384xbf16>
    %37 = arith.truncf %34 : vector<40x32xf32> to vector<40x32xbf16>
    %cst_23 = arith.constant dense<0.000000e+00> : vector<40x384xf32>
    %38 = tpu.matmul %37, %36, %cst_23 {dimension_numbers = #tpu.dot_dimension_numbers<[1], [0], [0], [1], [0, 0, 1, 1], [], []>} : vector<40x32xbf16>, vector<32x384xbf16>, vector<40x384xf32> -> vector<40x384xf32>
    %c0_24 = arith.constant 0 : index
    %c0_25 = arith.constant 0 : index
    %c0_26 = arith.constant 0 : index
    %39 = vector.load %arg9[%c0_24, %c0_25, %c0_26] : memref<2x1x384xf32, #tpu.memory_space<vmem>>, vector<1x1x384xf32>
    %40 = vector.shape_cast %39 : vector<1x1x384xf32> to vector<1x384xf32>
    %41 = vector.broadcast %40 : vector<1x384xf32> to vector<40x384xf32>
    %42 = arith.addf %38, %41 : vector<40x384xf32>
    %43 = vector.extract_strided_slice %42 {offsets = [0, 0], sizes = [40, 32], strides = [1, 1]} : vector<40x384xf32> to vector<40x32xf32>
    %44 = vector.extract_strided_slice %42 {offsets = [0, 128], sizes = [40, 32], strides = [1, 1]} : vector<40x384xf32> to vector<40x32xf32>
    %45 = vector.extract_strided_slice %42 {offsets = [0, 256], sizes = [40, 32], strides = [1, 1]} : vector<40x384xf32> to vector<40x32xf32>
    %46 = tpu.concatenate %44, %44, %44, %44 in 0 : vector<40x32xf32>, vector<40x32xf32>, vector<40x32xf32>, vector<40x32xf32> -> vector<160x32xf32>
    %47 = arith.mulf %46, %0 : vector<160x32xf32>
    %48 = arith.truncf %47 : vector<160x32xf32> to vector<160x32xbf16>
    %49 = tpu.concatenate %45, %45, %45, %45 in 0 : vector<40x32xf32>, vector<40x32xf32>, vector<40x32xf32>, vector<40x32xf32> -> vector<160x32xf32>
    %50 = arith.mulf %49, %0 : vector<160x32xf32>
    %51 = arith.truncf %50 : vector<160x32xf32> to vector<160x32xbf16>
    %52 = arith.truncf %43 : vector<40x32xf32> to vector<40x32xbf16>
    %cst_27 = arith.constant dense<0.000000e+00> : vector<40x160xf32>
    %53 = tpu.matmul %52, %48, %cst_27 {dimension_numbers = #tpu.dot_dimension_numbers<[1], [1], [0], [0], [0, 0, 1, 0], [], []>} : vector<40x32xbf16>, vector<160x32xbf16>, vector<40x160xf32> -> vector<40x160xf32>
    %54 = arith.addf %53, %2 : vector<40x160xf32>
    %cst_28 = arith.constant dense<0xFF800000> : vector<40xf32>
    %55 = vector.multi_reduction <maximumf>, %54, %cst_28 [1] : vector<40x160xf32> to vector<40xf32>
    %56 = vector.shape_cast %55 : vector<40xf32> to vector<40x1xf32>
    %57 = vector.broadcast %56 : vector<40x1xf32> to vector<40x160xf32>
    %58 = arith.subf %54, %57 : vector<40x160xf32>
    %59 = math.exp %58 : vector<40x160xf32>
    %60 = arith.truncf %59 : vector<40x160xf32> to vector<40x160xbf16>
    %cst_29 = arith.constant dense<0.000000e+00> : vector<40x32xf32>
    %61 = tpu.matmul %60, %1, %cst_29 {dimension_numbers = #tpu.dot_dimension_numbers<[1], [0], [0], [1], [0, 0, 1, 1], [], []>} : vector<40x160xbf16>, vector<160x32xbf16>, vector<40x32xf32> -> vector<40x32xf32>
    %cst_30 = arith.constant dense<0.000000e+00> : vector<40x32xf32>
    %62 = tpu.matmul %60, %51, %cst_30 {dimension_numbers = #tpu.dot_dimension_numbers<[1], [0], [0], [1], [0, 0, 1, 1], [], []>} : vector<40x160xbf16>, vector<160x32xbf16>, vector<40x32xf32> -> vector<40x32xf32>
    %63 = tpu.reciprocal %61 {approx = true} : vector<40x32xf32> -> vector<40x32xf32>
    %64 = arith.mulf %62, %63 : vector<40x32xf32>
    %c0_31 = arith.constant 0 : index
    %c0_32 = arith.constant 0 : index
    %c0_33 = arith.constant 0 : index
    %65 = vector.load %arg10[%c0_31, %c0_32, %c0_33] : memref<2x32x32xbf16, #tpu.memory_space<vmem>>, vector<1x32x32xbf16>
    %66 = vector.shape_cast %65 : vector<1x32x32xbf16> to vector<32x32xbf16>
    %67 = arith.truncf %64 : vector<40x32xf32> to vector<40x32xbf16>
    %cst_34 = arith.constant dense<0.000000e+00> : vector<40x32xf32>
    %68 = tpu.matmul %67, %66, %cst_34 {dimension_numbers = #tpu.dot_dimension_numbers<[1], [0], [0], [1], [0, 0, 1, 1], [], []>} : vector<40x32xbf16>, vector<32x32xbf16>, vector<40x32xf32> -> vector<40x32xf32>
    %69 = arith.addf %8, %68 : vector<40x32xf32>
    %c0_35 = arith.constant 0 : index
    %c0_36 = arith.constant 0 : index
    %c0_37 = arith.constant 0 : index
    %70 = vector.load %arg11[%c0_35, %c0_36, %c0_37] : memref<2x1x32xf32, #tpu.memory_space<vmem>>, vector<1x1x32xf32>
    %71 = vector.shape_cast %70 : vector<1x1x32xf32> to vector<1x32xf32>
    %72 = vector.broadcast %71 : vector<1x32xf32> to vector<40x32xf32>
    %73 = arith.addf %69, %72 : vector<40x32xf32>
    %c0_38 = arith.constant 0 : index
    %c0_39 = arith.constant 0 : index
    %c0_40 = arith.constant 0 : index
    %74 = vector.load %arg12[%c0_38, %c0_39, %c0_40] : memref<2x1x32xf32, #tpu.memory_space<vmem>>, vector<1x1x32xf32>
    %75 = vector.shape_cast %74 : vector<1x1x32xf32> to vector<1x32xf32>
    %c0_41 = arith.constant 0 : index
    %c0_42 = arith.constant 0 : index
    %c0_43 = arith.constant 0 : index
    %76 = vector.load %arg13[%c0_41, %c0_42, %c0_43] : memref<2x1x32xf32, #tpu.memory_space<vmem>>, vector<1x1x32xf32>
    %77 = vector.shape_cast %76 : vector<1x1x32xf32> to vector<1x32xf32>
    %cst_44 = arith.constant dense<0.000000e+00> : vector<40xf32>
    %78 = vector.multi_reduction <add>, %73, %cst_44 [1] : vector<40x32xf32> to vector<40xf32>
    %79 = vector.shape_cast %78 : vector<40xf32> to vector<40x1xf32>
    %cst_45 = arith.constant 3.200000e+01 : f32
    %80 = vector.broadcast %cst_45 : f32 to vector<40x1xf32>
    %81 = arith.divf %79, %80 : vector<40x1xf32>
    %82 = vector.broadcast %81 : vector<40x1xf32> to vector<40x32xf32>
    %83 = arith.subf %73, %82 : vector<40x32xf32>
    %84 = arith.mulf %83, %83 : vector<40x32xf32>
    %cst_46 = arith.constant dense<0.000000e+00> : vector<40xf32>
    %85 = vector.multi_reduction <add>, %84, %cst_46 [1] : vector<40x32xf32> to vector<40xf32>
    %86 = vector.shape_cast %85 : vector<40xf32> to vector<40x1xf32>
    %cst_47 = arith.constant 3.200000e+01 : f32
    %87 = vector.broadcast %cst_47 : f32 to vector<40x1xf32>
    %88 = arith.divf %86, %87 : vector<40x1xf32>
    %89 = vector.broadcast %81 : vector<40x1xf32> to vector<40x32xf32>
    %90 = arith.subf %73, %89 : vector<40x32xf32>
    %cst_48 = arith.constant 9.99999997E-7 : f32
    %91 = vector.broadcast %cst_48 : f32 to vector<40x1xf32>
    %92 = arith.addf %88, %91 : vector<40x1xf32>
    %93 = math.rsqrt %92 : vector<40x1xf32>
    %94 = vector.broadcast %93 : vector<40x1xf32> to vector<40x32xf32>
    %95 = arith.mulf %90, %94 : vector<40x32xf32>
    %96 = vector.broadcast %75 : vector<1x32xf32> to vector<40x32xf32>
    %97 = arith.mulf %95, %96 : vector<40x32xf32>
    %98 = vector.broadcast %77 : vector<1x32xf32> to vector<40x32xf32>
    %99 = arith.addf %97, %98 : vector<40x32xf32>
    %c0_49 = arith.constant 0 : index
    %c0_50 = arith.constant 0 : index
    %c0_51 = arith.constant 0 : index
    %100 = vector.load %arg14[%c0_49, %c0_50, %c0_51] : memref<2x32x128xbf16, #tpu.memory_space<vmem>>, vector<1x32x128xbf16>
    %101 = vector.shape_cast %100 : vector<1x32x128xbf16> to vector<32x128xbf16>
    %102 = arith.truncf %99 : vector<40x32xf32> to vector<40x32xbf16>
    %cst_52 = arith.constant dense<0.000000e+00> : vector<40x128xf32>
    %103 = tpu.matmul %102, %101, %cst_52 {dimension_numbers = #tpu.dot_dimension_numbers<[1], [0], [0], [1], [0, 0, 1, 1], [], []>} : vector<40x32xbf16>, vector<32x128xbf16>, vector<40x128xf32> -> vector<40x128xf32>
    %c0_53 = arith.constant 0 : index
    %c0_54 = arith.constant 0 : index
    %c0_55 = arith.constant 0 : index
    %104 = vector.load %arg15[%c0_53, %c0_54, %c0_55] : memref<2x1x128xf32, #tpu.memory_space<vmem>>, vector<1x1x128xf32>
    %105 = vector.shape_cast %104 : vector<1x1x128xf32> to vector<1x128xf32>
    %106 = vector.broadcast %105 : vector<1x128xf32> to vector<40x128xf32>
    %107 = arith.addf %103, %106 : vector<40x128xf32>
    %cst_56 = arith.constant 5.000000e-01 : f32
    %108 = vector.broadcast %cst_56 : f32 to vector<40x128xf32>
    %109 = arith.mulf %108, %107 : vector<40x128xf32>
    %cst_57 = arith.constant 4.471500e-02 : f32
    %110 = vector.broadcast %cst_57 : f32 to vector<40x128xf32>
    %111 = arith.mulf %110, %107 : vector<40x128xf32>
    %112 = arith.mulf %111, %107 : vector<40x128xf32>
    %113 = arith.mulf %112, %107 : vector<40x128xf32>
    %114 = arith.addf %107, %113 : vector<40x128xf32>
    %cst_58 = arith.constant 0.797884583 : f32
    %115 = vector.broadcast %cst_58 : f32 to vector<40x128xf32>
    %116 = arith.mulf %115, %114 : vector<40x128xf32>
    %117 = math.tanh %116 : vector<40x128xf32>
    %cst_59 = arith.constant 1.000000e+00 : f32
    %118 = vector.broadcast %cst_59 : f32 to vector<40x128xf32>
    %119 = arith.addf %118, %117 : vector<40x128xf32>
    %120 = arith.mulf %109, %119 : vector<40x128xf32>
    %c0_60 = arith.constant 0 : index
    %c0_61 = arith.constant 0 : index
    %c0_62 = arith.constant 0 : index
    %121 = vector.load %arg16[%c0_60, %c0_61, %c0_62] : memref<2x128x32xbf16, #tpu.memory_space<vmem>>, vector<1x128x32xbf16>
    %122 = vector.shape_cast %121 : vector<1x128x32xbf16> to vector<128x32xbf16>
    %123 = arith.truncf %120 : vector<40x128xf32> to vector<40x128xbf16>
    %cst_63 = arith.constant dense<0.000000e+00> : vector<40x32xf32>
    %124 = tpu.matmul %123, %122, %cst_63 {dimension_numbers = #tpu.dot_dimension_numbers<[1], [0], [0], [1], [0, 0, 1, 1], [], []>} : vector<40x128xbf16>, vector<128x32xbf16>, vector<40x32xf32> -> vector<40x32xf32>
    %125 = arith.addf %73, %124 : vector<40x32xf32>
    %c0_64 = arith.constant 0 : index
    %c0_65 = arith.constant 0 : index
    %c0_66 = arith.constant 0 : index
    %126 = vector.load %arg17[%c0_64, %c0_65, %c0_66] : memref<2x1x32xf32, #tpu.memory_space<vmem>>, vector<1x1x32xf32>
    %127 = vector.shape_cast %126 : vector<1x1x32xf32> to vector<1x32xf32>
    %128 = vector.broadcast %127 : vector<1x32xf32> to vector<40x32xf32>
    %129 = arith.addf %125, %128 : vector<40x32xf32>
    %c1 = arith.constant 1 : index
    %c0_67 = arith.constant 0 : index
    %c0_68 = arith.constant 0 : index
    %130 = vector.load %arg6[%c1, %c0_67, %c0_68] : memref<2x1x32xf32, #tpu.memory_space<vmem>>, vector<1x1x32xf32>
    %131 = vector.shape_cast %130 : vector<1x1x32xf32> to vector<1x32xf32>
    %c1_69 = arith.constant 1 : index
    %c0_70 = arith.constant 0 : index
    %c0_71 = arith.constant 0 : index
    %132 = vector.load %arg7[%c1_69, %c0_70, %c0_71] : memref<2x1x32xf32, #tpu.memory_space<vmem>>, vector<1x1x32xf32>
    %133 = vector.shape_cast %132 : vector<1x1x32xf32> to vector<1x32xf32>
    %cst_72 = arith.constant dense<0.000000e+00> : vector<40xf32>
    %134 = vector.multi_reduction <add>, %129, %cst_72 [1] : vector<40x32xf32> to vector<40xf32>
    %135 = vector.shape_cast %134 : vector<40xf32> to vector<40x1xf32>
    %cst_73 = arith.constant 3.200000e+01 : f32
    %136 = vector.broadcast %cst_73 : f32 to vector<40x1xf32>
    %137 = arith.divf %135, %136 : vector<40x1xf32>
    %138 = vector.broadcast %137 : vector<40x1xf32> to vector<40x32xf32>
    %139 = arith.subf %129, %138 : vector<40x32xf32>
    %140 = arith.mulf %139, %139 : vector<40x32xf32>
    %cst_74 = arith.constant dense<0.000000e+00> : vector<40xf32>
    %141 = vector.multi_reduction <add>, %140, %cst_74 [1] : vector<40x32xf32> to vector<40xf32>
    %142 = vector.shape_cast %141 : vector<40xf32> to vector<40x1xf32>
    %cst_75 = arith.constant 3.200000e+01 : f32
    %143 = vector.broadcast %cst_75 : f32 to vector<40x1xf32>
    %144 = arith.divf %142, %143 : vector<40x1xf32>
    %145 = vector.broadcast %137 : vector<40x1xf32> to vector<40x32xf32>
    %146 = arith.subf %129, %145 : vector<40x32xf32>
    %cst_76 = arith.constant 9.99999997E-7 : f32
    %147 = vector.broadcast %cst_76 : f32 to vector<40x1xf32>
    %148 = arith.addf %144, %147 : vector<40x1xf32>
    %149 = math.rsqrt %148 : vector<40x1xf32>
    %150 = vector.broadcast %149 : vector<40x1xf32> to vector<40x32xf32>
    %151 = arith.mulf %146, %150 : vector<40x32xf32>
    %152 = vector.broadcast %131 : vector<1x32xf32> to vector<40x32xf32>
    %153 = arith.mulf %151, %152 : vector<40x32xf32>
    %154 = vector.broadcast %133 : vector<1x32xf32> to vector<40x32xf32>
    %155 = arith.addf %153, %154 : vector<40x32xf32>
    %c1_77 = arith.constant 1 : index
    %c0_78 = arith.constant 0 : index
    %c0_79 = arith.constant 0 : index
    %156 = vector.load %arg8[%c1_77, %c0_78, %c0_79] : memref<2x32x384xbf16, #tpu.memory_space<vmem>>, vector<1x32x384xbf16>
    %157 = vector.shape_cast %156 : vector<1x32x384xbf16> to vector<32x384xbf16>
    %158 = arith.truncf %155 : vector<40x32xf32> to vector<40x32xbf16>
    %cst_80 = arith.constant dense<0.000000e+00> : vector<40x384xf32>
    %159 = tpu.matmul %158, %157, %cst_80 {dimension_numbers = #tpu.dot_dimension_numbers<[1], [0], [0], [1], [0, 0, 1, 1], [], []>} : vector<40x32xbf16>, vector<32x384xbf16>, vector<40x384xf32> -> vector<40x384xf32>
    %c1_81 = arith.constant 1 : index
    %c0_82 = arith.constant 0 : index
    %c0_83 = arith.constant 0 : index
    %160 = vector.load %arg9[%c1_81, %c0_82, %c0_83] : memref<2x1x384xf32, #tpu.memory_space<vmem>>, vector<1x1x384xf32>
    %161 = vector.shape_cast %160 : vector<1x1x384xf32> to vector<1x384xf32>
    %162 = vector.broadcast %161 : vector<1x384xf32> to vector<40x384xf32>
    %163 = arith.addf %159, %162 : vector<40x384xf32>
    %164 = vector.extract_strided_slice %163 {offsets = [0, 0], sizes = [40, 32], strides = [1, 1]} : vector<40x384xf32> to vector<40x32xf32>
    %165 = vector.extract_strided_slice %163 {offsets = [0, 128], sizes = [40, 32], strides = [1, 1]} : vector<40x384xf32> to vector<40x32xf32>
    %166 = vector.extract_strided_slice %163 {offsets = [0, 256], sizes = [40, 32], strides = [1, 1]} : vector<40x384xf32> to vector<40x32xf32>
    %167 = tpu.concatenate %165, %165, %165, %165 in 0 : vector<40x32xf32>, vector<40x32xf32>, vector<40x32xf32>, vector<40x32xf32> -> vector<160x32xf32>
    %168 = arith.mulf %167, %0 : vector<160x32xf32>
    %169 = arith.truncf %168 : vector<160x32xf32> to vector<160x32xbf16>
    %170 = tpu.concatenate %166, %166, %166, %166 in 0 : vector<40x32xf32>, vector<40x32xf32>, vector<40x32xf32>, vector<40x32xf32> -> vector<160x32xf32>
    %171 = arith.mulf %170, %0 : vector<160x32xf32>
    %172 = arith.truncf %171 : vector<160x32xf32> to vector<160x32xbf16>
    %173 = arith.truncf %164 : vector<40x32xf32> to vector<40x32xbf16>
    %cst_84 = arith.constant dense<0.000000e+00> : vector<40x160xf32>
    %174 = tpu.matmul %173, %169, %cst_84 {dimension_numbers = #tpu.dot_dimension_numbers<[1], [1], [0], [0], [0, 0, 1, 0], [], []>} : vector<40x32xbf16>, vector<160x32xbf16>, vector<40x160xf32> -> vector<40x160xf32>
    %175 = arith.addf %174, %2 : vector<40x160xf32>
    %cst_85 = arith.constant dense<0xFF800000> : vector<40xf32>
    %176 = vector.multi_reduction <maximumf>, %175, %cst_85 [1] : vector<40x160xf32> to vector<40xf32>
    %177 = vector.shape_cast %176 : vector<40xf32> to vector<40x1xf32>
    %178 = vector.broadcast %177 : vector<40x1xf32> to vector<40x160xf32>
    %179 = arith.subf %175, %178 : vector<40x160xf32>
    %180 = math.exp %179 : vector<40x160xf32>
    %181 = arith.truncf %180 : vector<40x160xf32> to vector<40x160xbf16>
    %cst_86 = arith.constant dense<0.000000e+00> : vector<40x32xf32>
    %182 = tpu.matmul %181, %1, %cst_86 {dimension_numbers = #tpu.dot_dimension_numbers<[1], [0], [0], [1], [0, 0, 1, 1], [], []>} : vector<40x160xbf16>, vector<160x32xbf16>, vector<40x32xf32> -> vector<40x32xf32>
    %cst_87 = arith.constant dense<0.000000e+00> : vector<40x32xf32>
    %183 = tpu.matmul %181, %172, %cst_87 {dimension_numbers = #tpu.dot_dimension_numbers<[1], [0], [0], [1], [0, 0, 1, 1], [], []>} : vector<40x160xbf16>, vector<160x32xbf16>, vector<40x32xf32> -> vector<40x32xf32>
    %184 = tpu.reciprocal %182 {approx = true} : vector<40x32xf32> -> vector<40x32xf32>
    %185 = arith.mulf %183, %184 : vector<40x32xf32>
    %c1_88 = arith.constant 1 : index
    %c0_89 = arith.constant 0 : index
    %c0_90 = arith.constant 0 : index
    %186 = vector.load %arg10[%c1_88, %c0_89, %c0_90] : memref<2x32x32xbf16, #tpu.memory_space<vmem>>, vector<1x32x32xbf16>
    %187 = vector.shape_cast %186 : vector<1x32x32xbf16> to vector<32x32xbf16>
    %188 = arith.truncf %185 : vector<40x32xf32> to vector<40x32xbf16>
    %cst_91 = arith.constant dense<0.000000e+00> : vector<40x32xf32>
    %189 = tpu.matmul %188, %187, %cst_91 {dimension_numbers = #tpu.dot_dimension_numbers<[1], [0], [0], [1], [0, 0, 1, 1], [], []>} : vector<40x32xbf16>, vector<32x32xbf16>, vector<40x32xf32> -> vector<40x32xf32>
    %190 = arith.addf %129, %189 : vector<40x32xf32>
    %c1_92 = arith.constant 1 : index
    %c0_93 = arith.constant 0 : index
    %c0_94 = arith.constant 0 : index
    %191 = vector.load %arg11[%c1_92, %c0_93, %c0_94] : memref<2x1x32xf32, #tpu.memory_space<vmem>>, vector<1x1x32xf32>
    %192 = vector.shape_cast %191 : vector<1x1x32xf32> to vector<1x32xf32>
    %193 = vector.broadcast %192 : vector<1x32xf32> to vector<40x32xf32>
    %194 = arith.addf %190, %193 : vector<40x32xf32>
    %c1_95 = arith.constant 1 : index
    %c0_96 = arith.constant 0 : index
    %c0_97 = arith.constant 0 : index
    %195 = vector.load %arg12[%c1_95, %c0_96, %c0_97] : memref<2x1x32xf32, #tpu.memory_space<vmem>>, vector<1x1x32xf32>
    %196 = vector.shape_cast %195 : vector<1x1x32xf32> to vector<1x32xf32>
    %c1_98 = arith.constant 1 : index
    %c0_99 = arith.constant 0 : index
    %c0_100 = arith.constant 0 : index
    %197 = vector.load %arg13[%c1_98, %c0_99, %c0_100] : memref<2x1x32xf32, #tpu.memory_space<vmem>>, vector<1x1x32xf32>
    %198 = vector.shape_cast %197 : vector<1x1x32xf32> to vector<1x32xf32>
    %cst_101 = arith.constant dense<0.000000e+00> : vector<40xf32>
    %199 = vector.multi_reduction <add>, %194, %cst_101 [1] : vector<40x32xf32> to vector<40xf32>
    %200 = vector.shape_cast %199 : vector<40xf32> to vector<40x1xf32>
    %cst_102 = arith.constant 3.200000e+01 : f32
    %201 = vector.broadcast %cst_102 : f32 to vector<40x1xf32>
    %202 = arith.divf %200, %201 : vector<40x1xf32>
    %203 = vector.broadcast %202 : vector<40x1xf32> to vector<40x32xf32>
    %204 = arith.subf %194, %203 : vector<40x32xf32>
    %205 = arith.mulf %204, %204 : vector<40x32xf32>
    %cst_103 = arith.constant dense<0.000000e+00> : vector<40xf32>
    %206 = vector.multi_reduction <add>, %205, %cst_103 [1] : vector<40x32xf32> to vector<40xf32>
    %207 = vector.shape_cast %206 : vector<40xf32> to vector<40x1xf32>
    %cst_104 = arith.constant 3.200000e+01 : f32
    %208 = vector.broadcast %cst_104 : f32 to vector<40x1xf32>
    %209 = arith.divf %207, %208 : vector<40x1xf32>
    %210 = vector.broadcast %202 : vector<40x1xf32> to vector<40x32xf32>
    %211 = arith.subf %194, %210 : vector<40x32xf32>
    %cst_105 = arith.constant 9.99999997E-7 : f32
    %212 = vector.broadcast %cst_105 : f32 to vector<40x1xf32>
    %213 = arith.addf %209, %212 : vector<40x1xf32>
    %214 = math.rsqrt %213 : vector<40x1xf32>
    %215 = vector.broadcast %214 : vector<40x1xf32> to vector<40x32xf32>
    %216 = arith.mulf %211, %215 : vector<40x32xf32>
    %217 = vector.broadcast %196 : vector<1x32xf32> to vector<40x32xf32>
    %218 = arith.mulf %216, %217 : vector<40x32xf32>
    %219 = vector.broadcast %198 : vector<1x32xf32> to vector<40x32xf32>
    %220 = arith.addf %218, %219 : vector<40x32xf32>
    %c1_106 = arith.constant 1 : index
    %c0_107 = arith.constant 0 : index
    %c0_108 = arith.constant 0 : index
    %221 = vector.load %arg14[%c1_106, %c0_107, %c0_108] : memref<2x32x128xbf16, #tpu.memory_space<vmem>>, vector<1x32x128xbf16>
    %222 = vector.shape_cast %221 : vector<1x32x128xbf16> to vector<32x128xbf16>
    %223 = arith.truncf %220 : vector<40x32xf32> to vector<40x32xbf16>
    %cst_109 = arith.constant dense<0.000000e+00> : vector<40x128xf32>
    %224 = tpu.matmul %223, %222, %cst_109 {dimension_numbers = #tpu.dot_dimension_numbers<[1], [0], [0], [1], [0, 0, 1, 1], [], []>} : vector<40x32xbf16>, vector<32x128xbf16>, vector<40x128xf32> -> vector<40x128xf32>
    %c1_110 = arith.constant 1 : index
    %c0_111 = arith.constant 0 : index
    %c0_112 = arith.constant 0 : index
    %225 = vector.load %arg15[%c1_110, %c0_111, %c0_112] : memref<2x1x128xf32, #tpu.memory_space<vmem>>, vector<1x1x128xf32>
    %226 = vector.shape_cast %225 : vector<1x1x128xf32> to vector<1x128xf32>
    %227 = vector.broadcast %226 : vector<1x128xf32> to vector<40x128xf32>
    %228 = arith.addf %224, %227 : vector<40x128xf32>
    %cst_113 = arith.constant 5.000000e-01 : f32
    %229 = vector.broadcast %cst_113 : f32 to vector<40x128xf32>
    %230 = arith.mulf %229, %228 : vector<40x128xf32>
    %cst_114 = arith.constant 4.471500e-02 : f32
    %231 = vector.broadcast %cst_114 : f32 to vector<40x128xf32>
    %232 = arith.mulf %231, %228 : vector<40x128xf32>
    %233 = arith.mulf %232, %228 : vector<40x128xf32>
    %234 = arith.mulf %233, %228 : vector<40x128xf32>
    %235 = arith.addf %228, %234 : vector<40x128xf32>
    %cst_115 = arith.constant 0.797884583 : f32
    %236 = vector.broadcast %cst_115 : f32 to vector<40x128xf32>
    %237 = arith.mulf %236, %235 : vector<40x128xf32>
    %238 = math.tanh %237 : vector<40x128xf32>
    %cst_116 = arith.constant 1.000000e+00 : f32
    %239 = vector.broadcast %cst_116 : f32 to vector<40x128xf32>
    %240 = arith.addf %239, %238 : vector<40x128xf32>
    %241 = arith.mulf %230, %240 : vector<40x128xf32>
    %c1_117 = arith.constant 1 : index
    %c0_118 = arith.constant 0 : index
    %c0_119 = arith.constant 0 : index
    %242 = vector.load %arg16[%c1_117, %c0_118, %c0_119] : memref<2x128x32xbf16, #tpu.memory_space<vmem>>, vector<1x128x32xbf16>
    %243 = vector.shape_cast %242 : vector<1x128x32xbf16> to vector<128x32xbf16>
    %244 = arith.truncf %241 : vector<40x128xf32> to vector<40x128xbf16>
    %cst_120 = arith.constant dense<0.000000e+00> : vector<40x32xf32>
    %245 = tpu.matmul %244, %243, %cst_120 {dimension_numbers = #tpu.dot_dimension_numbers<[1], [0], [0], [1], [0, 0, 1, 1], [], []>} : vector<40x128xbf16>, vector<128x32xbf16>, vector<40x32xf32> -> vector<40x32xf32>
    %246 = arith.addf %194, %245 : vector<40x32xf32>
    %c1_121 = arith.constant 1 : index
    %c0_122 = arith.constant 0 : index
    %c0_123 = arith.constant 0 : index
    %247 = vector.load %arg17[%c1_121, %c0_122, %c0_123] : memref<2x1x32xf32, #tpu.memory_space<vmem>>, vector<1x1x32xf32>
    %248 = vector.shape_cast %247 : vector<1x1x32xf32> to vector<1x32xf32>
    %249 = vector.broadcast %248 : vector<1x32xf32> to vector<40x32xf32>
    %250 = arith.addf %246, %249 : vector<40x32xf32>
    %c0_124 = arith.constant 0 : index
    %c0_125 = arith.constant 0 : index
    %251 = vector.load %arg4[%c0_124, %c0_125] : memref<8x40xf32, #tpu.memory_space<vmem>>, vector<8x40xf32>
    %cst_126 = arith.constant dense<0.000000e+00> : vector<8x32xf32>
    %252 = tpu.matmul %251, %250, %cst_126 {dimension_numbers = #tpu.dot_dimension_numbers<[1], [0], [0], [1], [0, 0, 1, 1], [], []>} : vector<8x40xf32>, vector<40x32xf32>, vector<8x32xf32> -> vector<8x32xf32>
    %c0_127 = arith.constant 0 : index
    %c0_128 = arith.constant 0 : index
    %253 = vector.load %arg18[%c0_127, %c0_128] : memref<1x32xf32, #tpu.memory_space<vmem>>, vector<1x32xf32>
    %c0_129 = arith.constant 0 : index
    %c0_130 = arith.constant 0 : index
    %254 = vector.load %arg19[%c0_129, %c0_130] : memref<1x32xf32, #tpu.memory_space<vmem>>, vector<1x32xf32>
    %cst_131 = arith.constant dense<0.000000e+00> : vector<8xf32>
    %255 = vector.multi_reduction <add>, %252, %cst_131 [1] : vector<8x32xf32> to vector<8xf32>
    %256 = vector.shape_cast %255 : vector<8xf32> to vector<8x1xf32>
    %cst_132 = arith.constant 3.200000e+01 : f32
    %257 = vector.broadcast %cst_132 : f32 to vector<8x1xf32>
    %258 = arith.divf %256, %257 : vector<8x1xf32>
    %259 = vector.broadcast %258 : vector<8x1xf32> to vector<8x32xf32>
    %260 = arith.subf %252, %259 : vector<8x32xf32>
    %261 = arith.mulf %260, %260 : vector<8x32xf32>
    %cst_133 = arith.constant dense<0.000000e+00> : vector<8xf32>
    %262 = vector.multi_reduction <add>, %261, %cst_133 [1] : vector<8x32xf32> to vector<8xf32>
    %263 = vector.shape_cast %262 : vector<8xf32> to vector<8x1xf32>
    %cst_134 = arith.constant 3.200000e+01 : f32
    %264 = vector.broadcast %cst_134 : f32 to vector<8x1xf32>
    %265 = arith.divf %263, %264 : vector<8x1xf32>
    %266 = vector.broadcast %258 : vector<8x1xf32> to vector<8x32xf32>
    %267 = arith.subf %252, %266 : vector<8x32xf32>
    %cst_135 = arith.constant 9.99999997E-7 : f32
    %268 = vector.broadcast %cst_135 : f32 to vector<8x1xf32>
    %269 = arith.addf %265, %268 : vector<8x1xf32>
    %270 = math.rsqrt %269 : vector<8x1xf32>
    %271 = vector.broadcast %270 : vector<8x1xf32> to vector<8x32xf32>
    %272 = arith.mulf %267, %271 : vector<8x32xf32>
    %273 = vector.broadcast %253 : vector<1x32xf32> to vector<8x32xf32>
    %274 = arith.mulf %272, %273 : vector<8x32xf32>
    %275 = vector.broadcast %254 : vector<1x32xf32> to vector<8x32xf32>
    %276 = arith.addf %274, %275 : vector<8x32xf32>
    %c0_136 = arith.constant 0 : index
    %c0_137 = arith.constant 0 : index
    %277 = vector.load %arg20[%c0_136, %c0_137] : memref<32x128xbf16, #tpu.memory_space<vmem>>, vector<32x128xbf16>
    %278 = arith.truncf %276 : vector<8x32xf32> to vector<8x32xbf16>
    %cst_138 = arith.constant dense<0.000000e+00> : vector<8x128xf32>
    %279 = tpu.matmul %278, %277, %cst_138 {dimension_numbers = #tpu.dot_dimension_numbers<[1], [0], [0], [1], [0, 0, 1, 1], [], []>} : vector<8x32xbf16>, vector<32x128xbf16>, vector<8x128xf32> -> vector<8x128xf32>
    %c0_139 = arith.constant 0 : index
    %c0_140 = arith.constant 0 : index
    %280 = vector.load %arg21[%c0_139, %c0_140] : memref<1x128xf32, #tpu.memory_space<vmem>>, vector<1x128xf32>
    %281 = vector.broadcast %280 : vector<1x128xf32> to vector<8x128xf32>
    %282 = arith.addf %279, %281 : vector<8x128xf32>
    %c0_141 = arith.constant 0 : index
    %c0_142 = arith.constant 0 : index
    %283 = vector.load %arg22[%c0_141, %c0_142] : memref<8x128xf32, #tpu.memory_space<vmem>>, vector<8x128xf32>
    tpu.vector_store %arg22[%c0_141, %c0_142], %282 {strides = array<i32>} : memref<8x128xf32, #tpu.memory_space<vmem>>, vector<8x128xf32>,
    return
  }
}

</mosaic_0001>

<llo_original>
// kernel: deit_forward.1
$region0: #{deit_forward.1}
  #allocation0 [shape = 'u32[]', space=smem, size = 0x4, offset = 0x4, fixed_abs, tag = 'smem constant byte address 0x4 - core index']
  #allocation1 [shape = 'u32[72,128]{1,0:T(1,128)}', space=vmem, size = 0x9000, scoped, tag = 'internal scratch']
  %s0 = inlined_call_operand.vmem [shape: f32[40,48], index: 0, kind: input, shape index: {}]
  %s1 = inlined_call_operand.vmem [shape: f32[40,32], index: 1, kind: input, shape index: {}]
  %s2 = inlined_call_operand.vmem [shape: f32[40,160], index: 2, kind: input, shape index: {}]
  %s3 = inlined_call_operand.vmem [shape: f32[160,32], index: 3, kind: input, shape index: {}]
  %s4 = inlined_call_operand.vmem [shape: f32[8,40], index: 4, kind: input, shape index: {}]
  %s5 = inlined_call_operand.vmem [shape: bf16[48,32], index: 5, kind: input, shape index: {}]
  %s6 = inlined_call_operand.vmem [shape: f32[2,1,32], index: 6, kind: input, shape index: {}]
  %s7 = inlined_call_operand.vmem [shape: f32[2,1,32], index: 7, kind: input, shape index: {}]
  %s8 = inlined_call_operand.vmem [shape: bf16[2,32,384], index: 8, kind: input, shape index: {}]
  %s9 = inlined_call_operand.vmem [shape: f32[2,1,384], index: 9, kind: input, shape index: {}]
  %s10 = inlined_call_operand.vmem [shape: bf16[2,32,32], index: 10, kind: input, shape index: {}]
  %s11 = inlined_call_operand.vmem [shape: f32[2,1,32], index: 11, kind: input, shape index: {}]
  %s12 = inlined_call_operand.vmem [shape: f32[2,1,32], index: 12, kind: input, shape index: {}]
  %s13 = inlined_call_operand.vmem [shape: f32[2,1,32], index: 13, kind: input, shape index: {}]
  %s14 = inlined_call_operand.vmem [shape: bf16[2,32,128], index: 14, kind: input, shape index: {}]
  %s15 = inlined_call_operand.vmem [shape: f32[2,1,128], index: 15, kind: input, shape index: {}]
  %s16 = inlined_call_operand.vmem [shape: bf16[2,128,32], index: 16, kind: input, shape index: {}]
  %s17 = inlined_call_operand.vmem [shape: f32[2,1,32], index: 17, kind: input, shape index: {}]
  %s18 = inlined_call_operand.vmem [shape: f32[1,32], index: 18, kind: input, shape index: {}]
  %s19 = inlined_call_operand.vmem [shape: f32[1,32], index: 19, kind: input, shape index: {}]
  %s20 = inlined_call_operand.vmem [shape: bf16[32,128], index: 20, kind: input, shape index: {}]
  %s21 = inlined_call_operand.vmem [shape: f32[1,128], index: 21, kind: input, shape index: {}]
  %s22 = inlined_call_operand.vmem [shape: f32[8,128], index: 22, kind: output, shape index: {}]
  %s23 = sld [smem:[#allocation0]]
  $region98: #{deit_forward.1} parent=0
    _
  %s25 = ssub.s32 1, %s23
  %s26 = scalar_select 0, %s25, %s23
  // Predicated region
  $region2: #{deit_forward.1} parent=0 // pred_check
    _
  $region3: #{deit_forward.1} parent=0 // pred_check_branch
    %28 = sbr.rel (0) target = $region5
  $region4: #{deit_forward.1} parent=0 // pred_region
    _
  $region5: #{deit_forward.1} parent=0 // pred_fallthru
    _
  // Predicated region
  $region6: #{deit_forward.1} parent=0 // pred_check
    _
  $region7: #{deit_forward.1} parent=0 // pred_check_branch
    %30 = sbr.rel (0) target = $region9
  $region8: #{deit_forward.1} parent=0 // pred_region
    _
  $region9: #{deit_forward.1} parent=0 // pred_fallthru
    _
  // Predicated region
  $region10: #{deit_forward.1} parent=0 // pred_check
    _
  $region11: #{deit_forward.1} parent=0 // pred_check_branch
    %32 = sbr.rel (0) target = $region13
  $region12: #{deit_forward.1} parent=0 // pred_region
    _
  $region13: #{deit_forward.1} parent=0 // pred_fallthru
    _
  // Predicated region
  $region14: #{deit_forward.1} parent=0 // pred_check
    _
  $region15: #{deit_forward.1} parent=0 // pred_check_branch
    %34 = sbr.rel (0) target = $region17
  $region16: #{deit_forward.1} parent=0 // pred_region
    _
  $region17: #{deit_forward.1} parent=0 // pred_fallthru
    _
  // Predicated region
  $region18: #{deit_forward.1} parent=0 // pred_check
    _
  $region19: #{deit_forward.1} parent=0 // pred_check_branch
    %36 = sbr.rel (0) target = $region21
  $region20: #{deit_forward.1} parent=0 // pred_region
    _
  $region21: #{deit_forward.1} parent=0 // pred_fallthru
    _
  // Predicated region
  $region22: #{deit_forward.1} parent=0 // pred_check
    _
  $region23: #{deit_forward.1} parent=0 // pred_check_branch
    %38 = sbr.rel (0) target = $region25
  $region24: #{deit_forward.1} parent=0 // pred_region
    _
  $region25: #{deit_forward.1} parent=0 // pred_fallthru
    _
  // Predicated region
  $region26: #{deit_forward.1} parent=0 // pred_check
    _
  $region27: #{deit_forward.1} parent=0 // pred_check_branch
    %40 = sbr.rel (0) target = $region29
  $region28: #{deit_forward.1} parent=0 // pred_region
    _
  $region29: #{deit_forward.1} parent=0 // pred_fallthru
    _
  // Predicated region
  $region30: #{deit_forward.1} parent=0 // pred_check
    _
  $region31: #{deit_forward.1} parent=0 // pred_check_branch
    %42 = sbr.rel (0) target = $region33
  $region32: #{deit_forward.1} parent=0 // pred_region
    _
  $region33: #{deit_forward.1} parent=0 // pred_fallthru
    _
  // Predicated region
  $region34: #{deit_forward.1} parent=0 // pred_check
    _
  $region35: #{deit_forward.1} parent=0 // pred_check_branch
    %44 = sbr.rel (0) target = $region37
  $region36: #{deit_forward.1} parent=0 // pred_region
    _
  $region37: #{deit_forward.1} parent=0 // pred_fallthru
    _
  // Predicated region
  $region38: #{deit_forward.1} parent=0 // pred_check
    _
  $region39: #{deit_forward.1} parent=0 // pred_check_branch
    %46 = sbr.rel (0) target = $region41
  $region40: #{deit_forward.1} parent=0 // pred_region
    _
  $region41: #{deit_forward.1} parent=0 // pred_fallthru
    _
  // Predicated region
  $region42: #{deit_forward.1} parent=0 // pred_check
    _
  $region43: #{deit_forward.1} parent=0 // pred_check_branch
    %48 = sbr.rel (0) target = $region45
  $region44: #{deit_forward.1} parent=0 // pred_region
    _
  $region45: #{deit_forward.1} parent=0 // pred_fallthru
    _
  // Predicated region
  $region46: #{deit_forward.1} parent=0 // pred_check
    _
  $region47: #{deit_forward.1} parent=0 // pred_check_branch
    %50 = sbr.rel (0) target = $region49
  $region48: #{deit_forward.1} parent=0 // pred_region
    _
  $region49: #{deit_forward.1} parent=0 // pred_fallthru
    _
  // Predicated region
  $region50: #{deit_forward.1} parent=0 // pred_check
    _
  $region51: #{deit_forward.1} parent=0 // pred_check_branch
    %52 = sbr.rel (0) target = $region53
  $region52: #{deit_forward.1} parent=0 // pred_region
    _
  $region53: #{deit_forward.1} parent=0 // pred_fallthru
    _
  // Predicated region
  $region54: #{deit_forward.1} parent=0 // pred_check
    _
  $region55: #{deit_forward.1} parent=0 // pred_check_branch
    %54 = sbr.rel (0) target = $region57
  $region56: #{deit_forward.1} parent=0 // pred_region
    _
  $region57: #{deit_forward.1} parent=0 // pred_fallthru
    _
  // Predicated region
  $region58: #{deit_forward.1} parent=0 // pred_check
    _
  $region59: #{deit_forward.1} parent=0 // pred_check_branch
    %56 = sbr.rel (0) target = $region61
  $region60: #{deit_forward.1} parent=0 // pred_region
    _
  $region61: #{deit_forward.1} parent=0 // pred_fallthru
    _
  // Predicated region
  $region62: #{deit_forward.1} parent=0 // pred_check
    _
  $region63: #{deit_forward.1} parent=0 // pred_check_branch
    %58 = sbr.rel (0) target = $region65
  $region64: #{deit_forward.1} parent=0 // pred_region
    _
  $region65: #{deit_forward.1} parent=0 // pred_fallthru
    _
  // Predicated region
  $region66: #{deit_forward.1} parent=0 // pred_check
    _
  $region67: #{deit_forward.1} parent=0 // pred_check_branch
    %60 = sbr.rel (0) target = $region69
  $region68: #{deit_forward.1} parent=0 // pred_region
    _
  $region69: #{deit_forward.1} parent=0 // pred_fallthru
    _
  // Predicated region
  $region70: #{deit_forward.1} parent=0 // pred_check
    _
  $region71: #{deit_forward.1} parent=0 // pred_check_branch
    %62 = sbr.rel (0) target = $region73
  $region72: #{deit_forward.1} parent=0 // pred_region
    _
  $region73: #{deit_forward.1} parent=0 // pred_fallthru
    _
  // Predicated region
  $region74: #{deit_forward.1} parent=0 // pred_check
    _
  $region75: #{deit_forward.1} parent=0 // pred_check_branch
    %64 = sbr.rel (0) target = $region77
  $region76: #{deit_forward.1} parent=0 // pred_region
    _
  $region77: #{deit_forward.1} parent=0 // pred_fallthru
    _
  // Predicated region
  $region78: #{deit_forward.1} parent=0 // pred_check
    _
  $region79: #{deit_forward.1} parent=0 // pred_check_branch
    %66 = sbr.rel (0) target = $region81
  $region80: #{deit_forward.1} parent=0 // pred_region
    _
  $region81: #{deit_forward.1} parent=0 // pred_fallthru
    _
  // Predicated region
  $region82: #{deit_forward.1} parent=0 // pred_check
    _
  $region83: #{deit_forward.1} parent=0 // pred_check_branch
    %68 = sbr.rel (0) target = $region85
  $region84: #{deit_forward.1} parent=0 // pred_region
    _
  $region85: #{deit_forward.1} parent=0 // pred_fallthru
    _
  // Predicated region
  $region86: #{deit_forward.1} parent=0 // pred_check
    _
  $region87: #{deit_forward.1} parent=0 // pred_check_branch
    %70 = sbr.rel (0) target = $region89
  $region88: #{deit_forward.1} parent=0 // pred_region
    _
  $region89: #{deit_forward.1} parent=0 // pred_fallthru
    _
  %v72 = vld [vmem:[%s3] sm:$0xff]
  %v73 = vld [vmem:[%s3 + $0x8] sm:$0xff]
  %v74 = vld [vmem:[%s3 + $0x10] sm:$0xff]
  %v75 = vld [vmem:[%s3 + $0x18] sm:$0xff]
  %v76 = vld [vmem:[%s3 + $0x20] sm:$0xff]
  %v77 = vld [vmem:[%s3 + $0x28] sm:$0xff]
  %v78 = vld [vmem:[%s3 + $0x30] sm:$0xff]
  %v79 = vld [vmem:[%s3 + $0x38] sm:$0xff]
  %v80 = vld [vmem:[%s3 + $0x40] sm:$0xff]
  %v81 = vld [vmem:[%s3 + $0x48] sm:$0xff]
  %v82 = vld [vmem:[%s3 + $0x50] sm:$0xff]
  %v83 = vld [vmem:[%s3 + $0x58] sm:$0xff]
  %v84 = vld [vmem:[%s3 + $0x60] sm:$0xff]
  %v85 = vld [vmem:[%s3 + $0x68] sm:$0xff]
  %v86 = vld [vmem:[%s3 + $0x70] sm:$0xff]
  %v87 = vld [vmem:[%s3 + $0x78] sm:$0xff]
  %v88 = vld [vmem:[%s3 + $0x80] sm:$0xff]
  %v89 = vld [vmem:[%s3 + $0x88] sm:$0xff]
  %v90 = vld [vmem:[%s3 + $0x90] sm:$0xff]
  %v91 = vld [vmem:[%s3 + $0x98] sm:$0xff]
  %v92 = vpack.c.bf16 %v73, %v72
  %v93 = vpack.c.bf16 %v75, %v74
  %v94 = vpack.c.bf16 %v77, %v76
  %v95 = vpack.c.bf16 %v79, %v78
  %v96 = vpack.c.bf16 %v81, %v80
  %v97 = vpack.c.bf16 %v83, %v82
  %v98 = vpack.c.bf16 %v85, %v84
  %v99 = vpack.c.bf16 %v87, %v86
  %v100 = vpack.c.bf16 %v89, %v88
  %v101 = vpack.c.bf16 %v91, %v90
  %v102 = vld [vmem:[%s2] sm:$0xff]
  %v103 = vld [vmem:[%s2 + $0x8] sm:$0xff]
  %v104 = vld [vmem:[%s2 + $0x10] sm:$0xff]
  %v105 = vld [vmem:[%s2 + $0x18] sm:$0xff]
  %v106 = vld [vmem:[%s2 + $0x20] sm:$0xff]
  %v107 = vld [vmem:[%s2 + $0x28] sm:$0xff]
  %v108 = vld [vmem:[%s2 + $0x30] sm:$0xff]
  %v109 = vld [vmem:[%s2 + $0x38] sm:$0xff]
  %v110 = vld [vmem:[%s2 + $0x40] sm:$0xff]
  %v111 = vld [vmem:[%s2 + $0x48] sm:$0xff]
  %v112 = vld [vmem:[%s0] sm:$0xff]
  %v113 = vld [vmem:[%s0 + $0x8] sm:$0xff]
  %v114 = vld [vmem:[%s0 + $0x10] sm:$0xff]
  %v115 = vld [vmem:[%s0 + $0x18] sm:$0xff]
  %v116 = vld [vmem:[%s0 + $0x20] sm:$0xff]
  %v117 = vld [vmem:[%s5] sm:$0xf]
  %v118 = vld [vmem:[%s5 + $0x4] sm:$0xf]
  %v119 = vld [vmem:[%s5 + $0x8] sm:$0xf]
  %v120 = vld [vmem:[%s5 + $0xc] sm:$0xf]
  %v121 = vld [vmem:[%s5 + $0x10] sm:$0xf]
  %v122 = vld [vmem:[%s5 + $0x14] sm:$0xf]
  %v123 = vpack.c.bf16 %v113, %v112
  %v124 = vpack.c.bf16 %v115, %v114
  %v125 = vpack.c.bf16 %v116, %v116
  %v126 = vld [vmem:[%s1] sm:$0xff]
  %v127 = vld [vmem:[%s1 + $0x8] sm:$0xff]
  %v128 = vld [vmem:[%s1 + $0x10] sm:$0xff]
  %v129 = vld [vmem:[%s1 + $0x18] sm:$0xff]
  %v130 = vld [vmem:[%s1 + $0x20] sm:$0xff]
  %v137 = vunpack.c.l.b16 %v117
  %v138 = vunpack.c.l.b16 %v118
  %v139 = vunpack.c.l.b16 %v119
  %v140 = vunpack.c.l.b16 %v120
  %v141 = vunpack.c.l.b16 %v121
  %v142 = vunpack.c.l.b16 %v122
  %v143 = vpack.c.b16 %v138, %v137
  %v144 = vpack.c.b16 %v140, %v139
  %v145 = vpack.c.b16 %v142, %v141
  %vm149 = vcmask 392192
  %v151 = vsel %vm149, %v123, 0
  %v154 = vsel %vm149, %v124, 0
  %v157 = vsel %vm149, %v125, 0
  %159 = vmatpush.bf16.msra.mxu0 0
  %160 = vmatpush.bf16.msra.mxu0 0
  %161 = vmatpush.bf16.msra.mxu0 0
  %162 = vmatpush.bf16.msra.mxu0 0
  %163 = vmatpush.bf16.msra.mxu0 0
  %164 = vmatpush.bf16.msra.mxu0 %v145
  %165 = vmatpush.bf16.msra.mxu0 %v144
  %166 = vmatpush.bf16.msra.mxu0 %v143
  %167 = vmatmul.bf16.gmra.mxu0 %v151
  %v168 = vpop.f32.mrf.mxu0
  %v169 = vadd.f32 %v126, %v168
  %v170 = vpop.f32.mrf.mxu0
  %v171 = vadd.f32 %v127, %v170
  %172 = vmatmul.bf16.gmra.mxu0 %v154
  %v173 = vpop.f32.mrf.mxu0
  %v174 = vadd.f32 %v128, %v173
  %v175 = vpop.f32.mrf.mxu0
  %v176 = vadd.f32 %v129, %v175
  %177 = vmatmul.bf16.gmra.mxu0 %v157
  %v178 = vpop.f32.mrf.mxu0
  %v179 = vadd.f32 %v130, %v178
  %v180 = vpop.f32.mrf.mxu0
  %181 = vdwg.mxu0
  %v182 = vld [vmem:[%s6] sm:$0x1]
  %v183 = vld [vmem:[%s7] sm:$0x1]
  %vm184 = vcmask 261120
  %v185 = vsel %vm184, %v169, 0.0
  %186 = vadd.xlane.f32.xlu0 %v185
  %v187 = vpop.xlane.xlu0 %186
  %v188 = vsel %vm184, %v171, 0.0
  %189 = vadd.xlane.f32.xlu0 %v188
  %v190 = vpop.xlane.xlu0 %189
  %v191 = vsel %vm184, %v174, 0.0
  %192 = vadd.xlane.f32.xlu0 %v191
  %v193 = vpop.xlane.xlu0 %192
  %v194 = vsel %vm184, %v176, 0.0
  %195 = vadd.xlane.f32.xlu0 %v194
  %v196 = vpop.xlane.xlu0 %195
  %v197 = vsel %vm184, %v179, 0.0
  %198 = vadd.xlane.f32.xlu0 %v197
  %v199 = vpop.xlane.xlu0 %198
  %v200 = vrcp.pop 32.0
  %v201 = vmul.f32 32.0, %v200
  %v202 = vsub.f32 1.0, %v201
  %v203 = vmul.f32 %v200, %v202
  %v204 = vadd.f32 %v200, %v203
  %vm205 = vweird.f32 %v200
  %v206 = vsel %vm205, %v200, %v204
  %v207 = vmul.f32 %v187, %v206
  %v208 = vmul.f32 %v190, %v206
  %v209 = vmul.f32 %v193, %v206
  %v210 = vmul.f32 %v196, %v206
  %v211 = vmul.f32 %v199, %v206
  %v212 = vsub.f32 %v169, %v207
  %v213 = vsub.f32 %v171, %v208
  %v214 = vsub.f32 %v174, %v209
  %v215 = vsub.f32 %v176, %v210
  %v216 = vsub.f32 %v179, %v211
  %v217 = vmul.f32 %v212, %v212
  %v218 = vmul.f32 %v213, %v213
  %v219 = vmul.f32 %v214, %v214
  %v220 = vmul.f32 %v215, %v215
  %v221 = vmul.f32 %v216, %v216
  %v222 = vsel %vm184, %v217, 0.0
  %223 = vadd.xlane.f32.xlu0 %v222
  %v224 = vpop.xlane.xlu0 %223
  %v225 = vsel %vm184, %v218, 0.0
  %226 = vadd.xlane.f32.xlu0 %v225
  %v227 = vpop.xlane.xlu0 %226
  %v228 = vsel %vm184, %v219, 0.0
  %229 = vadd.xlane.f32.xlu0 %v228
  %v230 = vpop.xlane.xlu0 %229
  %v231 = vsel %vm184, %v220, 0.0
  %232 = vadd.xlane.f32.xlu0 %v231
  %v233 = vpop.xlane.xlu0 %232
  %v234 = vsel %vm184, %v221, 0.0
  %235 = vadd.xlane.f32.xlu0 %v234
  %v236 = vpop.xlane.xlu0 %235
  %v237 = vmul.f32 %v224, %v206
  %v238 = vmul.f32 %v227, %v206
  %v239 = vmul.f32 %v230, %v206
  %v240 = vmul.f32 %v233, %v206
  %v241 = vmul.f32 %v236, %v206
  %v242 = vadd.f32 %v237, 1e-06
  %v243 = vadd.f32 %v238, 1e-06
  %v244 = vadd.f32 %v239, 1e-06
  %v245 = vadd.f32 %v240, 1e-06
  %v246 = vadd.f32 %v241, 1e-06
  %v247 = vrsqrt.pop %v242
  %v248 = vmul.f32 %v247, %v242
  %v249 = vmul.f32 %v248, %v247
  %v250 = vmul.f32 0.5, %v249
  %v251 = vsub.f32 1.5, %v250
  %v252 = vmul.f32 %v247, %v251
  %vm253 = vweird.f32 %v242
  %vm254 = vweird.f32 %v247
  %vm255 = vmor %vm253, %vm254
  %v256 = vsel %vm255, %v247, %v252
  %v257 = vrsqrt.pop %v243
  %v258 = vmul.f32 %v257, %v243
  %v259 = vmul.f32 %v258, %v257
  %v260 = vmul.f32 0.5, %v259
  %v261 = vsub.f32 1.5, %v260
  %v262 = vmul.f32 %v257, %v261
  %vm263 = vweird.f32 %v243
  %vm264 = vweird.f32 %v257
  %vm265 = vmor %vm263, %vm264
  %v266 = vsel %vm265, %v257, %v262
  %v267 = vrsqrt.pop %v244
  %v268 = vmul.f32 %v267, %v244
  %v269 = vmul.f32 %v268, %v267
  %v270 = vmul.f32 0.5, %v269
  %v271 = vsub.f32 1.5, %v270
  %v272 = vmul.f32 %v267, %v271
  %vm273 = vweird.f32 %v244
  %vm274 = vweird.f32 %v267
  %vm275 = vmor %vm273, %vm274
  %v276 = vsel %vm275, %v267, %v272
  %v277 = vrsqrt.pop %v245
  %v278 = vmul.f32 %v277, %v245
  %v279 = vmul.f32 %v278, %v277
  %v280 = vmul.f32 0.5, %v279
  %v281 = vsub.f32 1.5, %v280
  %v282 = vmul.f32 %v277, %v281
  %vm283 = vweird.f32 %v245
  %vm284 = vweird.f32 %v277
  %vm285 = vmor %vm283, %vm284
  %v286 = vsel %vm285, %v277, %v282
  %v287 = vrsqrt.pop %v246
  %v288 = vmul.f32 %v287, %v246
  %v289 = vmul.f32 %v288, %v287
  %v290 = vmul.f32 0.5, %v289
  %v291 = vsub.f32 1.5, %v290
  %v292 = vmul.f32 %v287, %v291
  %vm293 = vweird.f32 %v246
  %vm294 = vweird.f32 %v287
  %vm295 = vmor %vm293, %vm294
  %v296 = vsel %vm295, %v287, %v292
  %v297 = vmul.f32 %v212, %v256
  %v298 = vmul.f32 %v213, %v266
  %v299 = vmul.f32 %v214, %v276
  %v300 = vmul.f32 %v215, %v286
  %v301 = vmul.f32 %v216, %v296
  %v303 = vperm.slane %v182, 0
  %v305 = vmul.f32 %v297, %v303
  %v306 = vmul.f32 %v298, %v303
  %v307 = vmul.f32 %v299, %v303
  %v308 = vmul.f32 %v300, %v303
  %v309 = vmul.f32 %v301, %v303
  %v311 = vperm.slane %v183, 0
  %v313 = vadd.f32 %v305, %v311
  %v314 = vadd.f32 %v306, %v311
  %v315 = vadd.f32 %v307, %v311
  %v316 = vadd.f32 %v308, %v311
  %v317 = vadd.f32 %v309, %v311
  %v318 = vld [vmem:[%s8] sm:$0xff]
  %v319 = vld [vmem:[%s8 + $0x8] sm:$0xf]
  %v320 = vld [vmem:[%s8 + $0xc] sm:$0xff]
  %v321 = vld [vmem:[%s8 + $0x14] sm:$0xf]
  %v322 = vld [vmem:[%s8 + $0x18] sm:$0xff]
  %v323 = vld [vmem:[%s8 + $0x20] sm:$0xf]
  %v324 = vld [vmem:[%s8 + $0x24] sm:$0xff]
  %v325 = vld [vmem:[%s8 + $0x2c] sm:$0xf]
  %v326 = vpack.c.bf16 %v314, %v313
  %v327 = vpack.c.bf16 %v316, %v315
  %v328 = vpack.c.bf16 %v317, %v317
  %v329 = vld [vmem:[%s9] sm:$0x7]
  %v331 = vperm.slane %v329, 0
  %v332 = vperm.slane %v329, 1
  %v333 = vperm.slane %v329, 2
  %v345 = vunpack.c.l.b16 %v318
  %v346 = vunpack.c.h.b16 %v318
  %v347 = vunpack.c.l.b16 %v319
  %v348 = vunpack.c.l.b16 %v320
  %v349 = vunpack.c.h.b16 %v320
  %v350 = vunpack.c.l.b16 %v321
  %v351 = vunpack.c.l.b16 %v322
  %v352 = vunpack.c.h.b16 %v322
  %v353 = vunpack.c.l.b16 %v323
  %v354 = vunpack.c.l.b16 %v324
  %v355 = vunpack.c.h.b16 %v324
  %v356 = vunpack.c.l.b16 %v325
  %v357 = vpack.c.b16 %v348, %v345
  %v358 = vpack.c.b16 %v349, %v346
  %v359 = vpack.c.b16 %v350, %v347
  %v360 = vpack.c.b16 %v354, %v351
  %v361 = vpack.c.b16 %v355, %v352
  %v362 = vpack.c.b16 %v356, %v353
  %v370 = vsel %vm184, %v326, 0
  %v373 = vsel %vm184, %v327, 0
  %v376 = vsel %vm184, %v328, 0
  %378 = vmatpush.bf16.msra.mxu0 0
  %379 = vmatpush.bf16.msra.mxu0 0
  %380 = vmatpush.bf16.msra.mxu0 0
  %381 = vmatpush.bf16.msra.mxu0 0
  %382 = vmatpush.bf16.msra.mxu0 0
  %383 = vmatpush.bf16.msra.mxu0 0
  %384 = vmatpush.bf16.msra.mxu0 %v360
  %385 = vmatpush.bf16.msra.mxu0 %v357
  %386 = vmatmul.bf16.gmra.mxu0 %v370
  %v387 = vpop.f32.mrf.mxu0
  %v388 = vadd.f32 %v331, %v387
  %v389 = vpop.f32.mrf.mxu0
  %v390 = vadd.f32 %v331, %v389
  %391 = vmatmul.bf16.gmra.mxu0 %v373
  %v392 = vpop.f32.mrf.mxu0
  %v393 = vadd.f32 %v331, %v392
  %v394 = vpop.f32.mrf.mxu0
  %v395 = vadd.f32 %v331, %v394
  %396 = vmatmul.bf16.gmra.mxu0 %v376
  %v397 = vpop.f32.mrf.mxu0
  %v398 = vadd.f32 %v331, %v397
  %v399 = vpop.f32.mrf.mxu0
  %400 = vdwg.mxu0
  %401 = vmatpush.bf16.msra.mxu0 0
  %402 = vmatpush.bf16.msra.mxu0 0
  %403 = vmatpush.bf16.msra.mxu0 0
  %404 = vmatpush.bf16.msra.mxu0 0
  %405 = vmatpush.bf16.msra.mxu0 0
  %406 = vmatpush.bf16.msra.mxu0 0
  %407 = vmatpush.bf16.msra.mxu0 %v361
  %408 = vmatpush.bf16.msra.mxu0 %v358
  %409 = vmatmul.bf16.gmra.mxu0 %v370
  %v410 = vpop.f32.mrf.mxu0
  %v411 = vadd.f32 %v332, %v410
  %v412 = vpop.f32.mrf.mxu0
  %v413 = vadd.f32 %v332, %v412
  %414 = vmatmul.bf16.gmra.mxu0 %v373
  %v415 = vpop.f32.mrf.mxu0
  %v416 = vadd.f32 %v332, %v415
  %v417 = vpop.f32.mrf.mxu0
  %v418 = vadd.f32 %v332, %v417
  %419 = vmatmul.bf16.gmra.mxu0 %v376
  %v420 = vpop.f32.mrf.mxu0
  %v421 = vadd.f32 %v332, %v420
  %v422 = vpop.f32.mrf.mxu0
  %423 = vdwg.mxu0
  %424 = vmatpush.bf16.msra.mxu0 0
  %425 = vmatpush.bf16.msra.mxu0 0
  %426 = vmatpush.bf16.msra.mxu0 0
  %427 = vmatpush.bf16.msra.mxu0 0
  %428 = vmatpush.bf16.msra.mxu0 0
  %429 = vmatpush.bf16.msra.mxu0 0
  %430 = vmatpush.bf16.msra.mxu0 %v362
  %431 = vmatpush.bf16.msra.mxu0 %v359
  %432 = vmatmul.bf16.gmra.mxu0 %v370
  %v433 = vpop.f32.mrf.mxu0
  %v434 = vadd.f32 %v333, %v433
  %v435 = vpop.f32.mrf.mxu0
  %v436 = vadd.f32 %v333, %v435
  %437 = vmatmul.bf16.gmra.mxu0 %v373
  %v438 = vpop.f32.mrf.mxu0
  %v439 = vadd.f32 %v333, %v438
  %v440 = vpop.f32.mrf.mxu0
  %v441 = vadd.f32 %v333, %v440
  %442 = vmatmul.bf16.gmra.mxu0 %v376
  %v443 = vpop.f32.mrf.mxu0
  %v444 = vadd.f32 %v333, %v443
  %v445 = vpop.f32.mrf.mxu0
  %446 = vdwg.mxu0
  %v447 = vmul.f32 %v411, %v72
  %v448 = vmul.f32 %v413, %v73
  %v449 = vmul.f32 %v416, %v74
  %v450 = vmul.f32 %v418, %v75
  %v451 = vmul.f32 %v421, %v76
  %v452 = vmul.f32 %v411, %v77
  %v453 = vmul.f32 %v413, %v78
  %v454 = vmul.f32 %v416, %v79
  %v455 = vmul.f32 %v418, %v80
  %v456 = vmul.f32 %v421, %v81
  %v457 = vmul.f32 %v411, %v82
  %v458 = vmul.f32 %v413, %v83
  %v459 = vmul.f32 %v416, %v84
  %v460 = vmul.f32 %v418, %v85
  %v461 = vmul.f32 %v421, %v86
  %v462 = vmul.f32 %v411, %v87
  %v463 = vmul.f32 %v413, %v88
  %v464 = vmul.f32 %v416, %v89
  %v465 = vmul.f32 %v418, %v90
  %v466 = vmul.f32 %v421, %v91
  %v467 = vpack.c.bf16 %v448, %v447
  %v468 = vpack.c.bf16 %v450, %v449
  %v469 = vpack.c.bf16 %v452, %v451
  %v470 = vpack.c.bf16 %v454, %v453
  %v471 = vpack.c.bf16 %v456, %v455
  %v472 = vpack.c.bf16 %v458, %v457
  %v473 = vpack.c.bf16 %v460, %v459
  %v474 = vpack.c.bf16 %v462, %v461
  %v475 = vpack.c.bf16 %v464, %v463
  %v476 = vpack.c.bf16 %v466, %v465
  %v477 = vmul.f32 %v434, %v72
  %v478 = vmul.f32 %v436, %v73
  %v479 = vmul.f32 %v439, %v74
  %v480 = vmul.f32 %v441, %v75
  %v481 = vmul.f32 %v444, %v76
  %v482 = vmul.f32 %v434, %v77
  %v483 = vmul.f32 %v436, %v78
  %v484 = vmul.f32 %v439, %v79
  %v485 = vmul.f32 %v441, %v80
  %v486 = vmul.f32 %v444, %v81
  %v487 = vmul.f32 %v434, %v82
  %v488 = vmul.f32 %v436, %v83
  %v489 = vmul.f32 %v439, %v84
  %v490 = vmul.f32 %v441, %v85
  %v491 = vmul.f32 %v444, %v86
  %v492 = vmul.f32 %v434, %v87
  %v493 = vmul.f32 %v436, %v88
  %v494 = vmul.f32 %v439, %v89
  %v495 = vmul.f32 %v441, %v90
  %v496 = vmul.f32 %v444, %v91
  %v497 = vpack.c.bf16 %v478, %v477
  %v498 = vpack.c.bf16 %v480, %v479
  %v499 = vpack.c.bf16 %v482, %v481
  %v500 = vpack.c.bf16 %v484, %v483
  %v501 = vpack.c.bf16 %v486, %v485
  %v502 = vpack.c.bf16 %v488, %v487
  %v503 = vpack.c.bf16 %v490, %v489
  %v504 = vpack.c.bf16 %v492, %v491
  %v505 = vpack.c.bf16 %v494, %v493
  %v506 = vpack.c.bf16 %v496, %v495
  %v507 = vpack.c.bf16 %v390, %v388
  %v508 = vpack.c.bf16 %v395, %v393
  %v509 = vpack.c.bf16 %v398, %v398
  %v511 = vsel %vm184, %v507, 0
  %v514 = vsel %vm184, %v508, 0
  %v517 = vsel %vm184, %v509, 0
  %v520 = vsel %vm184, %v467, 0
  %v523 = vsel %vm184, %v468, 0
  %v526 = vsel %vm184, %v469, 0
  %v529 = vsel %vm184, %v470, 0
  %v532 = vsel %vm184, %v471, 0
  %v535 = vsel %vm184, %v472, 0
  %v538 = vsel %vm184, %v473, 0
  %v541 = vsel %vm184, %v474, 0
  %v544 = vsel %vm184, %v475, 0
  %v547 = vsel %vm184, %v476, 0
  %549 = vmatpush.bf16.xpose.msra.mxu0 %v541
  %550 = vmatpush.bf16.xpose.msra.mxu0 %v538
  %551 = vmatpush.bf16.xpose.msra.mxu0 %v535
  %552 = vmatpush.bf16.xpose.msra.mxu0 %v532
  %553 = vmatpush.bf16.xpose.msra.mxu0 %v529
  %554 = vmatpush.bf16.xpose.msra.mxu0 %v526
  %555 = vmatpush.bf16.xpose.msra.mxu0 %v523
  %556 = vmatpush.bf16.xpose.msra.mxu0 %v520
  %557 = vmatmul.bf16.gmra.mxu0 %v511
  %v558 = vpop.f32.mrf.mxu0
  %v559 = vadd.f32 %v102, %v558
  %v560 = vpop.f32.mrf.mxu0
  %v561 = vadd.f32 %v104, %v560
  %562 = vmatmul.bf16.gmra.mxu0 %v514
  %v563 = vpop.f32.mrf.mxu0
  %v564 = vadd.f32 %v106, %v563
  %v565 = vpop.f32.mrf.mxu0
  %v566 = vadd.f32 %v108, %v565
  %567 = vmatmul.bf16.gmra.mxu0 %v517
  %v568 = vpop.f32.mrf.mxu0
  %v569 = vadd.f32 %v110, %v568
  %v570 = vpop.f32.mrf.mxu0
  %571 = vdwg.mxu0
  %572 = vmatpush.bf16.xpose.msra.mxu0 0
  %573 = vmatpush.bf16.xpose.msra.mxu0 0
  %574 = vmatpush.bf16.xpose.msra.mxu0 0
  %575 = vmatpush.bf16.xpose.msra.mxu0 0
  %576 = vmatpush.bf16.xpose.msra.mxu0 0
  %577 = vmatpush.bf16.xpose.msra.mxu0 0
  %578 = vmatpush.bf16.xpose.msra.mxu0 %v547
  %579 = vmatpush.bf16.xpose.msra.mxu0 %v544
  %580 = vmatmul.bf16.gmra.mxu0 %v511
  %v581 = vpop.f32.mrf.mxu0
  %v582 = vadd.f32 %v103, %v581
  %v583 = vpop.f32.mrf.mxu0
  %v584 = vadd.f32 %v105, %v583
  %585 = vmatmul.bf16.gmra.mxu0 %v514
  %v586 = vpop.f32.mrf.mxu0
  %v587 = vadd.f32 %v107, %v586
  %v588 = vpop.f32.mrf.mxu0
  %v589 = vadd.f32 %v109, %v588
  %590 = vmatmul.bf16.gmra.mxu0 %v517
  %v591 = vpop.f32.mrf.mxu0
  %v592 = vadd.f32 %v111, %v591
  %v593 = vpop.f32.mrf.mxu0
  %594 = vdwg.mxu0
  %v595 = vsel %vm184, %v582, -inf
  %v596 = vmax.f32 %v559, %v595
  %597 = vmax.xlane.f32.xlu0 %v596
  %v598 = vpop.xlane.xlu0 %597
  %v599 = vsel %vm184, %v584, -inf
  %v600 = vmax.f32 %v561, %v599
  %601 = vmax.xlane.f32.xlu0 %v600
  %v602 = vpop.xlane.xlu0 %601
  %v603 = vsel %vm184, %v587, -inf
  %v604 = vmax.f32 %v564, %v603
  %605 = vmax.xlane.f32.xlu0 %v604
  %v606 = vpop.xlane.xlu0 %605
  %v607 = vsel %vm184, %v589, -inf
  %v608 = vmax.f32 %v566, %v607
  %609 = vmax.xlane.f32.xlu0 %v608
  %v610 = vpop.xlane.xlu0 %609
  %v611 = vsel %vm184, %v592, -inf
  %v612 = vmax.f32 %v569, %v611
  %613 = vmax.xlane.f32.xlu0 %v612
  %v614 = vpop.xlane.xlu0 %613
  %v615 = vsub.f32 %v559, %v598
  %v616 = vsub.f32 %v582, %v598
  %v617 = vsub.f32 %v561, %v602
  %v618 = vsub.f32 %v584, %v602
  %v619 = vsub.f32 %v564, %v606
  %v620 = vsub.f32 %v587, %v606
  %v621 = vsub.f32 %v566, %v610
  %v622 = vsub.f32 %v589, %v610
  %v623 = vsub.f32 %v569, %v614
  %v624 = vsub.f32 %v592, %v614
  %v625 = vmul.f32 %v615, 1.442695
  %v626 = vpow.pop %v625
  %v627 = vmul.f32 %v616, 1.442695
  %v628 = vpow.pop %v627
  %v629 = vmul.f32 %v617, 1.442695
  %v630 = vpow.pop %v629
  %v631 = vmul.f32 %v618, 1.442695
  %v632 = vpow.pop %v631
  %v633 = vmul.f32 %v619, 1.442695
  %v634 = vpow.pop %v633
  %v635 = vmul.f32 %v620, 1.442695
  %v636 = vpow.pop %v635
  %v637 = vmul.f32 %v621, 1.442695
  %v638 = vpow.pop %v637
  %v639 = vmul.f32 %v622, 1.442695
  %v640 = vpow.pop %v639
  %v641 = vmul.f32 %v623, 1.442695
  %v642 = vpow.pop %v641
  %v643 = vmul.f32 %v624, 1.442695
  %v644 = vpow.pop %v643
  %v645 = vpack.c.bf16 %v630, %v626
  %v646 = vpack.c.bf16 %v632, %v628
  %v647 = vpack.c.bf16 %v638, %v634
  %v648 = vpack.c.bf16 %v640, %v636
  %v649 = vpack.c.bf16 %v642, %v642
  %v650 = vpack.c.bf16 %v644, %v644
  %v652 = vsel %vm184, %v646, 0
  %v655 = vsel %vm184, %v648, 0
  %v658 = vsel %vm184, %v650, 0
  %660 = vmatpush.bf16.msra.mxu0 %v99
  %661 = vmatpush.bf16.msra.mxu0 %v98
  %662 = vmatpush.bf16.msra.mxu0 %v97
  %663 = vmatpush.bf16.msra.mxu0 %v96
  %664 = vmatpush.bf16.msra.mxu0 %v95
  %665 = vmatpush.bf16.msra.mxu0 %v94
  %666 = vmatpush.bf16.msra.mxu0 %v93
  %667 = vmatpush.bf16.msra.mxu0 %v92
  %668 = vmatmul.bf16.gmra.mxu0 %v645
  %v669 = vpop.f32.mrf.mxu0
  %v670 = vadd.f32 0.0, %v669
  %v671 = vpop.f32.mrf.mxu0
  %v672 = vadd.f32 0.0, %v671
  %673 = vmatmul.bf16.gmra.mxu0 %v647
  %v674 = vpop.f32.mrf.mxu0
  %v675 = vadd.f32 0.0, %v674
  %v676 = vpop.f32.mrf.mxu0
  %v677 = vadd.f32 0.0, %v676
  %678 = vmatmul.bf16.gmra.mxu0 %v649
  %v679 = vpop.f32.mrf.mxu0
  %v680 = vadd.f32 0.0, %v679
  %v681 = vpop.f32.mrf.mxu0
  %682 = vdwg.mxu0
  %683 = vmatpush.bf16.msra.mxu0 0
  %684 = vmatpush.bf16.msra.mxu0 0
  %685 = vmatpush.bf16.msra.mxu0 0
  %686 = vmatpush.bf16.msra.mxu0 0
  %687 = vmatpush.bf16.msra.mxu0 0
  %688 = vmatpush.bf16.msra.mxu0 0
  %689 = vmatpush.bf16.msra.mxu0 %v101
  %690 = vmatpush.bf16.msra.mxu0 %v100
  %691 = vmatmul.bf16.gmra.mxu0 %v652
  %v692 = vpop.f32.mrf.mxu0
  %v693 = vadd.f32 %v670, %v692
  %v694 = vpop.f32.mrf.mxu0
  %v695 = vadd.f32 %v672, %v694
  %696 = vmatmul.bf16.gmra.mxu0 %v655
  %v697 = vpop.f32.mrf.mxu0
  %v698 = vadd.f32 %v675, %v697
  %v699 = vpop.f32.mrf.mxu0
  %v700 = vadd.f32 %v677, %v699
  %701 = vmatmul.bf16.gmra.mxu0 %v658
  %v702 = vpop.f32.mrf.mxu0
  %v703 = vadd.f32 %v680, %v702
  %v704 = vpop.f32.mrf.mxu0
  %705 = vdwg.mxu0
  %706 = vmatpush.bf16.msra.mxu0 %v504
  %707 = vmatpush.bf16.msra.mxu0 %v503
  %708 = vmatpush.bf16.msra.mxu0 %v502
  %709 = vmatpush.bf16.msra.mxu0 %v501
  %710 = vmatpush.bf16.msra.mxu0 %v500
  %711 = vmatpush.bf16.msra.mxu0 %v499
  %712 = vmatpush.bf16.msra.mxu0 %v498
  %713 = vmatpush.bf16.msra.mxu0 %v497
  %714 = vmatmul.bf16.gmra.mxu0 %v645
  %v715 = vpop.f32.mrf.mxu0
  %v716 = vadd.f32 0.0, %v715
  %v717 = vpop.f32.mrf.mxu0
  %v718 = vadd.f32 0.0, %v717
  %719 = vmatmul.bf16.gmra.mxu0 %v647
  %v720 = vpop.f32.mrf.mxu0
  %v721 = vadd.f32 0.0, %v720
  %v722 = vpop.f32.mrf.mxu0
  %v723 = vadd.f32 0.0, %v722
  %724 = vmatmul.bf16.gmra.mxu0 %v649
  %v725 = vpop.f32.mrf.mxu0
  %v726 = vadd.f32 0.0, %v725
  %v727 = vpop.f32.mrf.mxu0
  %728 = vdwg.mxu0
  %729 = vmatpush.bf16.msra.mxu0 0
  %730 = vmatpush.bf16.msra.mxu0 0
  %731 = vmatpush.bf16.msra.mxu0 0
  %732 = vmatpush.bf16.msra.mxu0 0
  %733 = vmatpush.bf16.msra.mxu0 0
  %734 = vmatpush.bf16.msra.mxu0 0
  %735 = vmatpush.bf16.msra.mxu0 %v506
  %736 = vmatpush.bf16.msra.mxu0 %v505
  %737 = vmatmul.bf16.gmra.mxu0 %v652
  %v738 = vpop.f32.mrf.mxu0
  %v739 = vadd.f32 %v716, %v738
  %v740 = vpop.f32.mrf.mxu0
  %v741 = vadd.f32 %v718, %v740
  %742 = vmatmul.bf16.gmra.mxu0 %v655
  %v743 = vpop.f32.mrf.mxu0
  %v744 = vadd.f32 %v721, %v743
  %v745 = vpop.f32.mrf.mxu0
  %v746 = vadd.f32 %v723, %v745
  %747 = vmatmul.bf16.gmra.mxu0 %v658
  %v748 = vpop.f32.mrf.mxu0
  %v749 = vadd.f32 %v726, %v748
  %v750 = vpop.f32.mrf.mxu0
  %751 = vdwg.mxu0
  %v752 = vrcp.pop %v693
  %v753 = vrcp.pop %v695
  %v754 = vrcp.pop %v698
  %v755 = vrcp.pop %v700
  %v756 = vrcp.pop %v703
  %v757 = vmul.f32 %v739, %v752
  %v758 = vmul.f32 %v741, %v753
  %v759 = vmul.f32 %v744, %v754
  %v760 = vmul.f32 %v746, %v755
  %v761 = vmul.f32 %v749, %v756
  %v762 = vld [vmem:[%s10] sm:$0xf]
  %v763 = vld [vmem:[%s10 + $0x4] sm:$0xf]
  %v764 = vld [vmem:[%s10 + $0x8] sm:$0xf]
  %v765 = vld [vmem:[%s10 + $0xc] sm:$0xf]
  %v766 = vpack.c.bf16 %v758, %v757
  %v767 = vpack.c.bf16 %v760, %v759
  %v768 = vpack.c.bf16 %v761, %v761
  %v773 = vunpack.c.l.b16 %v762
  %v774 = vunpack.c.l.b16 %v763
  %v775 = vunpack.c.l.b16 %v764
  %v776 = vunpack.c.l.b16 %v765
  %v777 = vpack.c.b16 %v774, %v773
  %v778 = vpack.c.b16 %v776, %v775
  %v782 = vsel %vm184, %v766, 0
  %v785 = vsel %vm184, %v767, 0
  %v788 = vsel %vm184, %v768, 0
  %790 = vmatpush.bf16.msra.mxu0 0
  %791 = vmatpush.bf16.msra.mxu0 0
  %792 = vmatpush.bf16.msra.mxu0 0
  %793 = vmatpush.bf16.msra.mxu0 0
  %794 = vmatpush.bf16.msra.mxu0 0
  %795 = vmatpush.bf16.msra.mxu0 0
  %796 = vmatpush.bf16.msra.mxu0 %v778
  %797 = vmatpush.bf16.msra.mxu0 %v777
  %798 = vmatmul.bf16.gmra.mxu0 %v782
  %v799 = vpop.f32.mrf.mxu0
  %v800 = vadd.f32 0.0, %v799
  %v801 = vpop.f32.mrf.mxu0
  %v802 = vadd.f32 0.0, %v801
  %803 = vmatmul.bf16.gmra.mxu0 %v785
  %v804 = vpop.f32.mrf.mxu0
  %v805 = vadd.f32 0.0, %v804
  %v806 = vpop.f32.mrf.mxu0
  %v807 = vadd.f32 0.0, %v806
  %808 = vmatmul.bf16.gmra.mxu0 %v788
  %v809 = vpop.f32.mrf.mxu0
  %v810 = vadd.f32 0.0, %v809
  %v811 = vpop.f32.mrf.mxu0
  %812 = vdwg.mxu0
  %v813 = vadd.f32 %v169, %v800
  %v814 = vadd.f32 %v171, %v802
  %v815 = vadd.f32 %v174, %v805
  %v816 = vadd.f32 %v176, %v807
  %v817 = vadd.f32 %v179, %v810
  %v818 = vld [vmem:[%s11] sm:$0x1]
  %v820 = vperm.slane %v818, 0
  %v822 = vadd.f32 %v813, %v820
  %v823 = vadd.f32 %v814, %v820
  %v824 = vadd.f32 %v815, %v820
  %v825 = vadd.f32 %v816, %v820
  %v826 = vadd.f32 %v817, %v820
  %v827 = vld [vmem:[%s12] sm:$0x1]
  %v828 = vld [vmem:[%s13] sm:$0x1]
  %v829 = vsel %vm184, %v822, 0.0
  %830 = vadd.xlane.f32.xlu0 %v829
  %v831 = vpop.xlane.xlu0 %830
  %v832 = vsel %vm184, %v823, 0.0
  %833 = vadd.xlane.f32.xlu0 %v832
  %v834 = vpop.xlane.xlu0 %833
  %v835 = vsel %vm184, %v824, 0.0
  %836 = vadd.xlane.f32.xlu0 %v835
  %v837 = vpop.xlane.xlu0 %836
  %v838 = vsel %vm184, %v825, 0.0
  %839 = vadd.xlane.f32.xlu0 %v838
  %v840 = vpop.xlane.xlu0 %839
  %v841 = vsel %vm184, %v826, 0.0
  %842 = vadd.xlane.f32.xlu0 %v841
  %v843 = vpop.xlane.xlu0 %842
  %v844 = vmul.f32 %v831, %v206
  %v845 = vmul.f32 %v834, %v206
  %v846 = vmul.f32 %v837, %v206
  %v847 = vmul.f32 %v840, %v206
  %v848 = vmul.f32 %v843, %v206
  %v849 = vsub.f32 %v822, %v844
  %v850 = vsub.f32 %v823, %v845
  %v851 = vsub.f32 %v824, %v846
  %v852 = vsub.f32 %v825, %v847
  %v853 = vsub.f32 %v826, %v848
  %v854 = vmul.f32 %v849, %v849
  %v855 = vmul.f32 %v850, %v850
  %v856 = vmul.f32 %v851, %v851
  %v857 = vmul.f32 %v852, %v852
  %v858 = vmul.f32 %v853, %v853
  %v859 = vsel %vm184, %v854, 0.0
  %860 = vadd.xlane.f32.xlu0 %v859
  %v861 = vpop.xlane.xlu0 %860
  %v862 = vsel %vm184, %v855, 0.0
  %863 = vadd.xlane.f32.xlu0 %v862
  %v864 = vpop.xlane.xlu0 %863
  %v865 = vsel %vm184, %v856, 0.0
  %866 = vadd.xlane.f32.xlu0 %v865
  %v867 = vpop.xlane.xlu0 %866
  %v868 = vsel %vm184, %v857, 0.0
  %869 = vadd.xlane.f32.xlu0 %v868
  %v870 = vpop.xlane.xlu0 %869
  %v871 = vsel %vm184, %v858, 0.0
  %872 = vadd.xlane.f32.xlu0 %v871
  %v873 = vpop.xlane.xlu0 %872
  %v874 = vmul.f32 %v861, %v206
  %v875 = vmul.f32 %v864, %v206
  %v876 = vmul.f32 %v867, %v206
  %v877 = vmul.f32 %v870, %v206
  %v878 = vmul.f32 %v873, %v206
  %v879 = vadd.f32 %v874, 1e-06
  %v880 = vadd.f32 %v875, 1e-06
  %v881 = vadd.f32 %v876, 1e-06
  %v882 = vadd.f32 %v877, 1e-06
  %v883 = vadd.f32 %v878, 1e-06
  %v884 = vrsqrt.pop %v879
  %v885 = vmul.f32 %v884, %v879
  %v886 = vmul.f32 %v885, %v884
  %v887 = vmul.f32 0.5, %v886
  %v888 = vsub.f32 1.5, %v887
  %v889 = vmul.f32 %v884, %v888
  %vm890 = vweird.f32 %v879
  %vm891 = vweird.f32 %v884
  %vm892 = vmor %vm890, %vm891
  %v893 = vsel %vm892, %v884, %v889
  %v894 = vrsqrt.pop %v880
  %v895 = vmul.f32 %v894, %v880
  %v896 = vmul.f32 %v895, %v894
  %v897 = vmul.f32 0.5, %v896
  %v898 = vsub.f32 1.5, %v897
  %v899 = vmul.f32 %v894, %v898
  %vm900 = vweird.f32 %v880
  %vm901 = vweird.f32 %v894
  %vm902 = vmor %vm900, %vm901
  %v903 = vsel %vm902, %v894, %v899
  %v904 = vrsqrt.pop %v881
  %v905 = vmul.f32 %v904, %v881
  %v906 = vmul.f32 %v905, %v904
  %v907 = vmul.f32 0.5, %v906
  %v908 = vsub.f32 1.5, %v907
  %v909 = vmul.f32 %v904, %v908
  %vm910 = vweird.f32 %v881
  %vm911 = vweird.f32 %v904
  %vm912 = vmor %vm910, %vm911
  %v913 = vsel %vm912, %v904, %v909
  %v914 = vrsqrt.pop %v882
  %v915 = vmul.f32 %v914, %v882
  %v916 = vmul.f32 %v915, %v914
  %v917 = vmul.f32 0.5, %v916
  %v918 = vsub.f32 1.5, %v917
  %v919 = vmul.f32 %v914, %v918
  %vm920 = vweird.f32 %v882
  %vm921 = vweird.f32 %v914
  %vm922 = vmor %vm920, %vm921
  %v923 = vsel %vm922, %v914, %v919
  %v924 = vrsqrt.pop %v883
  %v925 = vmul.f32 %v924, %v883
  %v926 = vmul.f32 %v925, %v924
  %v927 = vmul.f32 0.5, %v926
  %v928 = vsub.f32 1.5, %v927
  %v929 = vmul.f32 %v924, %v928
  %vm930 = vweird.f32 %v883
  %vm931 = vweird.f32 %v924
  %vm932 = vmor %vm930, %vm931
  %v933 = vsel %vm932, %v924, %v929
  %v934 = vmul.f32 %v849, %v893
  %v935 = vmul.f32 %v850, %v903
  %v936 = vmul.f32 %v851, %v913
  %v937 = vmul.f32 %v852, %v923
  %v938 = vmul.f32 %v853, %v933
  %v940 = vperm.slane %v827, 0
  %v942 = vmul.f32 %v934, %v940
  %v943 = vmul.f32 %v935, %v940
  %v944 = vmul.f32 %v936, %v940
  %v945 = vmul.f32 %v937, %v940
  %v946 = vmul.f32 %v938, %v940
  %v948 = vperm.slane %v828, 0
  %v950 = vadd.f32 %v942, %v948
  %v951 = vadd.f32 %v943, %v948
  %v952 = vadd.f32 %v944, %v948
  %v953 = vadd.f32 %v945, %v948
  %v954 = vadd.f32 %v946, %v948
  %v955 = vld [vmem:[%s14] sm:$0xf]
  %v956 = vld [vmem:[%s14 + $0x4] sm:$0xf]
  %v957 = vld [vmem:[%s14 + $0x8] sm:$0xf]
  %v958 = vld [vmem:[%s14 + $0xc] sm:$0xf]
  %v959 = vpack.c.bf16 %v951, %v950
  %v960 = vpack.c.bf16 %v953, %v952
  %v961 = vpack.c.bf16 %v954, %v954
  %v962 = vld [vmem:[%s15] sm:$0x1]
  %v964 = vperm.slane %v962, 0
  %v970 = vunpack.c.l.b16 %v955
  %v971 = vunpack.c.l.b16 %v956
  %v972 = vunpack.c.l.b16 %v957
  %v973 = vunpack.c.l.b16 %v958
  %v974 = vpack.c.b16 %v971, %v970
  %v975 = vpack.c.b16 %v973, %v972
  %v979 = vsel %vm184, %v959, 0
  %v982 = vsel %vm184, %v960, 0
  %v985 = vsel %vm184, %v961, 0
  %987 = vmatpush.bf16.msra.mxu0 0
  %988 = vmatpush.bf16.msra.mxu0 0
  %989 = vmatpush.bf16.msra.mxu0 0
  %990 = vmatpush.bf16.msra.mxu0 0
  %991 = vmatpush.bf16.msra.mxu0 0
  %992 = vmatpush.bf16.msra.mxu0 0
  %993 = vmatpush.bf16.msra.mxu0 %v975
  %994 = vmatpush.bf16.msra.mxu0 %v974
  %995 = vmatmul.bf16.gmra.mxu0 %v979
  %v996 = vpop.f32.mrf.mxu0
  %v997 = vadd.f32 %v964, %v996
  %v998 = vpop.f32.mrf.mxu0
  %v999 = vadd.f32 %v964, %v998
  %1000 = vmatmul.bf16.gmra.mxu0 %v982
  %v1001 = vpop.f32.mrf.mxu0
  %v1002 = vadd.f32 %v964, %v1001
  %v1003 = vpop.f32.mrf.mxu0
  %v1004 = vadd.f32 %v964, %v1003
  %1005 = vmatmul.bf16.gmra.mxu0 %v985
  %v1006 = vpop.f32.mrf.mxu0
  %v1007 = vadd.f32 %v964, %v1006
  %v1008 = vpop.f32.mrf.mxu0
  %1009 = vdwg.mxu0
  %v1010 = vmul.f32 %v997, 0.5
  %v1011 = vmul.f32 %v999, 0.5
  %v1012 = vmul.f32 %v1002, 0.5
  %v1013 = vmul.f32 %v1004, 0.5
  %v1014 = vmul.f32 %v1007, 0.5
  %v1015 = vmul.f32 %v997, 0.044715
  %v1016 = vmul.f32 %v999, 0.044715
  %v1017 = vmul.f32 %v1002, 0.044715
  %v1018 = vmul.f32 %v1004, 0.044715
  %v1019 = vmul.f32 %v1007, 0.044715
  %v1020 = vmul.f32 %v1015, %v997
  %v1021 = vmul.f32 %v1016, %v999
  %v1022 = vmul.f32 %v1017, %v1002
  %v1023 = vmul.f32 %v1018, %v1004
  %v1024 = vmul.f32 %v1019, %v1007
  %v1025 = vmul.f32 %v1020, %v997
  %v1026 = vmul.f32 %v1021, %v999
  %v1027 = vmul.f32 %v1022, %v1002
  %v1028 = vmul.f32 %v1023, %v1004
  %v1029 = vmul.f32 %v1024, %v1007
  %v1030 = vadd.f32 %v997, %v1025
  %v1031 = vadd.f32 %v999, %v1026
  %v1032 = vadd.f32 %v1002, %v1027
  %v1033 = vadd.f32 %v1004, %v1028
  %v1034 = vadd.f32 %v1007, %v1029
  %v1035 = vmul.f32 %v1030, 0.7978846
  %v1036 = vmul.f32 %v1031, 0.7978846
  %v1037 = vmul.f32 %v1032, 0.7978846
  %v1038 = vmul.f32 %v1033, 0.7978846
  %v1039 = vmul.f32 %v1034, 0.7978846
  %v1040 = vtanh.pop %v1035
  %v1041 = vtanh.pop %v1036
  %v1042 = vtanh.pop %v1037
  %v1043 = vtanh.pop %v1038
  %v1044 = vtanh.pop %v1039
  %v1045 = vadd.f32 %v1040, 1.0
  %v1046 = vadd.f32 %v1041, 1.0
  %v1047 = vadd.f32 %v1042, 1.0
  %v1048 = vadd.f32 %v1043, 1.0
  %v1049 = vadd.f32 %v1044, 1.0
  %v1050 = vmul.f32 %v1010, %v1045
  %v1051 = vmul.f32 %v1011, %v1046
  %v1052 = vmul.f32 %v1012, %v1047
  %v1053 = vmul.f32 %v1013, %v1048
  %v1054 = vmul.f32 %v1014, %v1049
  %v1055 = vld [vmem:[%s16] sm:$0xf]
  %v1056 = vld [vmem:[%s16 + $0x4] sm:$0xf]
  %v1057 = vld [vmem:[%s16 + $0x8] sm:$0xf]
  %v1058 = vld [vmem:[%s16 + $0xc] sm:$0xf]
  %v1059 = vld [vmem:[%s16 + $0x10] sm:$0xf]
  %v1060 = vld [vmem:[%s16 + $0x14] sm:$0xf]
  %v1061 = vld [vmem:[%s16 + $0x18] sm:$0xf]
  %v1062 = vld [vmem:[%s16 + $0x1c] sm:$0xf]
  %v1063 = vld [vmem:[%s16 + $0x20] sm:$0xf]
  %v1064 = vld [vmem:[%s16 + $0x24] sm:$0xf]
  %v1065 = vld [vmem:[%s16 + $0x28] sm:$0xf]
  %v1066 = vld [vmem:[%s16 + $0x2c] sm:$0xf]
  %v1067 = vld [vmem:[%s16 + $0x30] sm:$0xf]
  %v1068 = vld [vmem:[%s16 + $0x34] sm:$0xf]
  %v1069 = vld [vmem:[%s16 + $0x38] sm:$0xf]
  %v1070 = vld [vmem:[%s16 + $0x3c] sm:$0xf]
  %v1071 = vpack.c.bf16 %v1051, %v1050
  %v1072 = vpack.c.bf16 %v1053, %v1052
  %v1073 = vpack.c.bf16 %v1054, %v1054
  %v1090 = vunpack.c.l.b16 %v1055
  %v1091 = vunpack.c.l.b16 %v1056
  %v1092 = vunpack.c.l.b16 %v1057
  %v1093 = vunpack.c.l.b16 %v1058
  %v1094 = vunpack.c.l.b16 %v1059
  %v1095 = vunpack.c.l.b16 %v1060
  %v1096 = vunpack.c.l.b16 %v1061
  %v1097 = vunpack.c.l.b16 %v1062
  %v1098 = vunpack.c.l.b16 %v1063
  %v1099 = vunpack.c.l.b16 %v1064
  %v1100 = vunpack.c.l.b16 %v1065
  %v1101 = vunpack.c.l.b16 %v1066
  %v1102 = vunpack.c.l.b16 %v1067
  %v1103 = vunpack.c.l.b16 %v1068
  %v1104 = vunpack.c.l.b16 %v1069
  %v1105 = vunpack.c.l.b16 %v1070
  %v1106 = vpack.c.b16 %v1091, %v1090
  %v1107 = vpack.c.b16 %v1093, %v1092
  %v1108 = vpack.c.b16 %v1095, %v1094
  %v1109 = vpack.c.b16 %v1097, %v1096
  %v1110 = vpack.c.b16 %v1099, %v1098
  %v1111 = vpack.c.b16 %v1101, %v1100
  %v1112 = vpack.c.b16 %v1103, %v1102
  %v1113 = vpack.c.b16 %v1105, %v1104
  %1122 = vmatpush.bf16.msra.mxu0 %v1113
  %1123 = vmatpush.bf16.msra.mxu0 %v1112
  %1124 = vmatpush.bf16.msra.mxu0 %v1111
  %1125 = vmatpush.bf16.msra.mxu0 %v1110
  %1126 = vmatpush.bf16.msra.mxu0 %v1109
  %1127 = vmatpush.bf16.msra.mxu0 %v1108
  %1128 = vmatpush.bf16.msra.mxu0 %v1107
  %1129 = vmatpush.bf16.msra.mxu0 %v1106
  %1130 = vmatmul.bf16.gmra.mxu0 %v1071
  %v1131 = vpop.f32.mrf.mxu0
  %v1132 = vadd.f32 0.0, %v1131
  %v1133 = vpop.f32.mrf.mxu0
  %v1134 = vadd.f32 0.0, %v1133
  %1135 = vmatmul.bf16.gmra.mxu0 %v1072
  %v1136 = vpop.f32.mrf.mxu0
  %v1137 = vadd.f32 0.0, %v1136
  %v1138 = vpop.f32.mrf.mxu0
  %v1139 = vadd.f32 0.0, %v1138
  %1140 = vmatmul.bf16.gmra.mxu0 %v1073
  %v1141 = vpop.f32.mrf.mxu0
  %v1142 = vadd.f32 0.0, %v1141
  %v1143 = vpop.f32.mrf.mxu0
  %1144 = vdwg.mxu0
  %v1145 = vadd.f32 %v822, %v1132
  %v1146 = vadd.f32 %v823, %v1134
  %v1147 = vadd.f32 %v824, %v1137
  %v1148 = vadd.f32 %v825, %v1139
  %v1149 = vadd.f32 %v826, %v1142
  %v1150 = vld [vmem:[%s17] sm:$0x1]
  %v1152 = vperm.slane %v1150, 0
  %v1154 = vadd.f32 %v1145, %v1152
  %v1155 = vadd.f32 %v1146, %v1152
  %v1156 = vadd.f32 %v1147, %v1152
  %v1157 = vadd.f32 %v1148, %v1152
  %v1158 = vadd.f32 %v1149, %v1152
  %s1159 = scalar_lea.vmem %s6, 1
  %v1160 = vld [vmem:[%s1159] sm:$0x1]
  %s1161 = scalar_lea.vmem %s7, 1
  %v1162 = vld [vmem:[%s1161] sm:$0x1]
  %v1163 = vsel %vm184, %v1154, 0.0
  %1164 = vadd.xlane.f32.xlu0 %v1163
  %v1165 = vpop.xlane.xlu0 %1164
  %v1166 = vsel %vm184, %v1155, 0.0
  %1167 = vadd.xlane.f32.xlu0 %v1166
  %v1168 = vpop.xlane.xlu0 %1167
  %v1169 = vsel %vm184, %v1156, 0.0
  %1170 = vadd.xlane.f32.xlu0 %v1169
  %v1171 = vpop.xlane.xlu0 %1170
  %v1172 = vsel %vm184, %v1157, 0.0
  %1173 = vadd.xlane.f32.xlu0 %v1172
  %v1174 = vpop.xlane.xlu0 %1173
  %v1175 = vsel %vm184, %v1158, 0.0
  %1176 = vadd.xlane.f32.xlu0 %v1175
  %v1177 = vpop.xlane.xlu0 %1176
  %v1178 = vmul.f32 %v1165, %v206
  %v1179 = vmul.f32 %v1168, %v206
  %v1180 = vmul.f32 %v1171, %v206
  %v1181 = vmul.f32 %v1174, %v206
  %v1182 = vmul.f32 %v1177, %v206
  %v1183 = vsub.f32 %v1154, %v1178
  %v1184 = vsub.f32 %v1155, %v1179
  %v1185 = vsub.f32 %v1156, %v1180
  %v1186 = vsub.f32 %v1157, %v1181
  %v1187 = vsub.f32 %v1158, %v1182
  %v1188 = vmul.f32 %v1183, %v1183
  %v1189 = vmul.f32 %v1184, %v1184
  %v1190 = vmul.f32 %v1185, %v1185
  %v1191 = vmul.f32 %v1186, %v1186
  %v1192 = vmul.f32 %v1187, %v1187
  %v1193 = vsel %vm184, %v1188, 0.0
  %1194 = vadd.xlane.f32.xlu0 %v1193
  %v1195 = vpop.xlane.xlu0 %1194
  %v1196 = vsel %vm184, %v1189, 0.0
  %1197 = vadd.xlane.f32.xlu0 %v1196
  %v1198 = vpop.xlane.xlu0 %1197
  %v1199 = vsel %vm184, %v1190, 0.0
  %1200 = vadd.xlane.f32.xlu0 %v1199
  %v1201 = vpop.xlane.xlu0 %1200
  %v1202 = vsel %vm184, %v1191, 0.0
  %1203 = vadd.xlane.f32.xlu0 %v1202
  %v1204 = vpop.xlane.xlu0 %1203
  %v1205 = vsel %vm184, %v1192, 0.0
  %1206 = vadd.xlane.f32.xlu0 %v1205
  %v1207 = vpop.xlane.xlu0 %1206
  %v1208 = vmul.f32 %v1195, %v206
  %v1209 = vmul.f32 %v1198, %v206
  %v1210 = vmul.f32 %v1201, %v206
  %v1211 = vmul.f32 %v1204, %v206
  %v1212 = vmul.f32 %v1207, %v206
  %v1213 = vadd.f32 %v1208, 1e-06
  %v1214 = vadd.f32 %v1209, 1e-06
  %v1215 = vadd.f32 %v1210, 1e-06
  %v1216 = vadd.f32 %v1211, 1e-06
  %v1217 = vadd.f32 %v1212, 1e-06
  %v1218 = vrsqrt.pop %v1213
  %v1219 = vmul.f32 %v1218, %v1213
  %v1220 = vmul.f32 %v1219, %v1218
  %v1221 = vmul.f32 0.5, %v1220
  %v1222 = vsub.f32 1.5, %v1221
  %v1223 = vmul.f32 %v1218, %v1222
  %vm1224 = vweird.f32 %v1213
  %vm1225 = vweird.f32 %v1218
  %vm1226 = vmor %vm1224, %vm1225
  %v1227 = vsel %vm1226, %v1218, %v1223
  %v1228 = vrsqrt.pop %v1214
  %v1229 = vmul.f32 %v1228, %v1214
  %v1230 = vmul.f32 %v1229, %v1228
  %v1231 = vmul.f32 0.5, %v1230
  %v1232 = vsub.f32 1.5, %v1231
  %v1233 = vmul.f32 %v1228, %v1232
  %vm1234 = vweird.f32 %v1214
  %vm1235 = vweird.f32 %v1228
  %vm1236 = vmor %vm1234, %vm1235
  %v1237 = vsel %vm1236, %v1228, %v1233
  %v1238 = vrsqrt.pop %v1215
  %v1239 = vmul.f32 %v1238, %v1215
  %v1240 = vmul.f32 %v1239, %v1238
  %v1241 = vmul.f32 0.5, %v1240
  %v1242 = vsub.f32 1.5, %v1241
  %v1243 = vmul.f32 %v1238, %v1242
  %vm1244 = vweird.f32 %v1215
  %vm1245 = vweird.f32 %v1238
  %vm1246 = vmor %vm1244, %vm1245
  %v1247 = vsel %vm1246, %v1238, %v1243
  %v1248 = vrsqrt.pop %v1216
  %v1249 = vmul.f32 %v1248, %v1216
  %v1250 = vmul.f32 %v1249, %v1248
  %v1251 = vmul.f32 0.5, %v1250
  %v1252 = vsub.f32 1.5, %v1251
  %v1253 = vmul.f32 %v1248, %v1252
  %vm1254 = vweird.f32 %v1216
  %vm1255 = vweird.f32 %v1248
  %vm1256 = vmor %vm1254, %vm1255
  %v1257 = vsel %vm1256, %v1248, %v1253
  %v1258 = vrsqrt.pop %v1217
  %v1259 = vmul.f32 %v1258, %v1217
  %v1260 = vmul.f32 %v1259, %v1258
  %v1261 = vmul.f32 0.5, %v1260
  %v1262 = vsub.f32 1.5, %v1261
  %v1263 = vmul.f32 %v1258, %v1262
  %vm1264 = vweird.f32 %v1217
  %vm1265 = vweird.f32 %v1258
  %vm1266 = vmor %vm1264, %vm1265
  %v1267 = vsel %vm1266, %v1258, %v1263
  %v1268 = vmul.f32 %v1183, %v1227
  %v1269 = vmul.f32 %v1184, %v1237
  %v1270 = vmul.f32 %v1185, %v1247
  %v1271 = vmul.f32 %v1186, %v1257
  %v1272 = vmul.f32 %v1187, %v1267
  %v1274 = vperm.slane %v1160, 0
  %v1276 = vmul.f32 %v1268, %v1274
  %v1277 = vmul.f32 %v1269, %v1274
  %v1278 = vmul.f32 %v1270, %v1274
  %v1279 = vmul.f32 %v1271, %v1274
  %v1280 = vmul.f32 %v1272, %v1274
  %v1282 = vperm.slane %v1162, 0
  %v1284 = vadd.f32 %v1276, %v1282
  %v1285 = vadd.f32 %v1277, %v1282
  %v1286 = vadd.f32 %v1278, %v1282
  %v1287 = vadd.f32 %v1279, %v1282
  %v1288 = vadd.f32 %v1280, %v1282
  %s1289 = scalar_lea.vmem %s8, 48
  %v1290 = vld [vmem:[%s1289] sm:$0xff]
  %v1291 = vld [vmem:[%s1289 + $0x8] sm:$0xf]
  %v1292 = vld [vmem:[%s1289 + $0xc] sm:$0xff]
  %v1293 = vld [vmem:[%s1289 + $0x14] sm:$0xf]
  %v1294 = vld [vmem:[%s1289 + $0x18] sm:$0xff]
  %v1295 = vld [vmem:[%s1289 + $0x20] sm:$0xf]
  %v1296 = vld [vmem:[%s1289 + $0x24] sm:$0xff]
  %v1297 = vld [vmem:[%s1289 + $0x2c] sm:$0xf]
  %v1298 = vpack.c.bf16 %v1285, %v1284
  %v1299 = vpack.c.bf16 %v1287, %v1286
  %v1300 = vpack.c.bf16 %v1288, %v1288
  %s1301 = scalar_lea.vmem %s9, 3
  %v1302 = vld [vmem:[%s1301] sm:$0x7]
  %v1304 = vperm.slane %v1302, 0
  %v1305 = vperm.slane %v1302, 1
  %v1306 = vperm.slane %v1302, 2
  %v1318 = vunpack.c.l.b16 %v1290
  %v1319 = vunpack.c.h.b16 %v1290
  %v1320 = vunpack.c.l.b16 %v1291
  %v1321 = vunpack.c.l.b16 %v1292
  %v1322 = vunpack.c.h.b16 %v1292
  %v1323 = vunpack.c.l.b16 %v1293
  %v1324 = vunpack.c.l.b16 %v1294
  %v1325 = vunpack.c.h.b16 %v1294
  %v1326 = vunpack.c.l.b16 %v1295
  %v1327 = vunpack.c.l.b16 %v1296
  %v1328 = vunpack.c.h.b16 %v1296
  %v1329 = vunpack.c.l.b16 %v1297
  %v1330 = vpack.c.b16 %v1321, %v1318
  %v1331 = vpack.c.b16 %v1322, %v1319
  %v1332 = vpack.c.b16 %v1323, %v1320
  %v1333 = vpack.c.b16 %v1327, %v1324
  %v1334 = vpack.c.b16 %v1328, %v1325
  %v1335 = vpack.c.b16 %v1329, %v1326
  %v1343 = vsel %vm184, %v1298, 0
  %v1346 = vsel %vm184, %v1299, 0
  %v1349 = vsel %vm184, %v1300, 0
  %1351 = vmatpush.bf16.msra.mxu0 0
  %1352 = vmatpush.bf16.msra.mxu0 0
  %1353 = vmatpush.bf16.msra.mxu0 0
  %1354 = vmatpush.bf16.msra.mxu0 0
  %1355 = vmatpush.bf16.msra.mxu0 0
  %1356 = vmatpush.bf16.msra.mxu0 0
  %1357 = vmatpush.bf16.msra.mxu0 %v1333
  %1358 = vmatpush.bf16.msra.mxu0 %v1330
  %1359 = vmatmul.bf16.gmra.mxu0 %v1343
  %v1360 = vpop.f32.mrf.mxu0
  %v1361 = vadd.f32 %v1304, %v1360
  %v1362 = vpop.f32.mrf.mxu0
  %v1363 = vadd.f32 %v1304, %v1362
  %1364 = vmatmul.bf16.gmra.mxu0 %v1346
  %v1365 = vpop.f32.mrf.mxu0
  %v1366 = vadd.f32 %v1304, %v1365
  %v1367 = vpop.f32.mrf.mxu0
  %v1368 = vadd.f32 %v1304, %v1367
  %1369 = vmatmul.bf16.gmra.mxu0 %v1349
  %v1370 = vpop.f32.mrf.mxu0
  %v1371 = vadd.f32 %v1304, %v1370
  %v1372 = vpop.f32.mrf.mxu0
  %1373 = vdwg.mxu0
  %1374 = vmatpush.bf16.msra.mxu0 0
  %1375 = vmatpush.bf16.msra.mxu0 0
  %1376 = vmatpush.bf16.msra.mxu0 0
  %1377 = vmatpush.bf16.msra.mxu0 0
  %1378 = vmatpush.bf16.msra.mxu0 0
  %1379 = vmatpush.bf16.msra.mxu0 0
  %1380 = vmatpush.bf16.msra.mxu0 %v1334
  %1381 = vmatpush.bf16.msra.mxu0 %v1331
  %1382 = vmatmul.bf16.gmra.mxu0 %v1343
  %v1383 = vpop.f32.mrf.mxu0
  %v1384 = vadd.f32 %v1305, %v1383
  %v1385 = vpop.f32.mrf.mxu0
  %v1386 = vadd.f32 %v1305, %v1385
  %1387 = vmatmul.bf16.gmra.mxu0 %v1346
  %v1388 = vpop.f32.mrf.mxu0
  %v1389 = vadd.f32 %v1305, %v1388
  %v1390 = vpop.f32.mrf.mxu0
  %v1391 = vadd.f32 %v1305, %v1390
  %1392 = vmatmul.bf16.gmra.mxu0 %v1349
  %v1393 = vpop.f32.mrf.mxu0
  %v1394 = vadd.f32 %v1305, %v1393
  %v1395 = vpop.f32.mrf.mxu0
  %1396 = vdwg.mxu0
  %1397 = vmatpush.bf16.msra.mxu0 0
  %1398 = vmatpush.bf16.msra.mxu0 0
  %1399 = vmatpush.bf16.msra.mxu0 0
  %1400 = vmatpush.bf16.msra.mxu0 0
  %1401 = vmatpush.bf16.msra.mxu0 0
  %1402 = vmatpush.bf16.msra.mxu0 0
  %1403 = vmatpush.bf16.msra.mxu0 %v1335
  %1404 = vmatpush.bf16.msra.mxu0 %v1332
  %1405 = vmatmul.bf16.gmra.mxu0 %v1343
  %v1406 = vpop.f32.mrf.mxu0
  %v1407 = vadd.f32 %v1306, %v1406
  %v1408 = vpop.f32.mrf.mxu0
  %v1409 = vadd.f32 %v1306, %v1408
  %1410 = vmatmul.bf16.gmra.mxu0 %v1346
  %v1411 = vpop.f32.mrf.mxu0
  %v1412 = vadd.f32 %v1306, %v1411
  %v1413 = vpop.f32.mrf.mxu0
  %v1414 = vadd.f32 %v1306, %v1413
  %1415 = vmatmul.bf16.gmra.mxu0 %v1349
  %v1416 = vpop.f32.mrf.mxu0
  %v1417 = vadd.f32 %v1306, %v1416
  %v1418 = vpop.f32.mrf.mxu0
  %1419 = vdwg.mxu0
  %v1420 = vmul.f32 %v1384, %v72
  %v1421 = vmul.f32 %v1386, %v73
  %v1422 = vmul.f32 %v1389, %v74
  %v1423 = vmul.f32 %v1391, %v75
  %v1424 = vmul.f32 %v1394, %v76
  %v1425 = vmul.f32 %v1384, %v77
  %v1426 = vmul.f32 %v1386, %v78
  %v1427 = vmul.f32 %v1389, %v79
  %v1428 = vmul.f32 %v1391, %v80
  %v1429 = vmul.f32 %v1394, %v81
  %v1430 = vmul.f32 %v1384, %v82
  %v1431 = vmul.f32 %v1386, %v83
  %v1432 = vmul.f32 %v1389, %v84
  %v1433 = vmul.f32 %v1391, %v85
  %v1434 = vmul.f32 %v1394, %v86
  %v1435 = vmul.f32 %v1384, %v87
  %v1436 = vmul.f32 %v1386, %v88
  %v1437 = vmul.f32 %v1389, %v89
  %v1438 = vmul.f32 %v1391, %v90
  %v1439 = vmul.f32 %v1394, %v91
  %v1440 = vpack.c.bf16 %v1421, %v1420
  %v1441 = vpack.c.bf16 %v1423, %v1422
  %v1442 = vpack.c.bf16 %v1425, %v1424
  %v1443 = vpack.c.bf16 %v1427, %v1426
  %v1444 = vpack.c.bf16 %v1429, %v1428
  %v1445 = vpack.c.bf16 %v1431, %v1430
  %v1446 = vpack.c.bf16 %v1433, %v1432
  %v1447 = vpack.c.bf16 %v1435, %v1434
  %v1448 = vpack.c.bf16 %v1437, %v1436
  %v1449 = vpack.c.bf16 %v1439, %v1438
  %v1450 = vmul.f32 %v1407, %v72
  %v1451 = vmul.f32 %v1409, %v73
  %v1452 = vmul.f32 %v1412, %v74
  %v1453 = vmul.f32 %v1414, %v75
  %v1454 = vmul.f32 %v1417, %v76
  %v1455 = vmul.f32 %v1407, %v77
  %v1456 = vmul.f32 %v1409, %v78
  %v1457 = vmul.f32 %v1412, %v79
  %v1458 = vmul.f32 %v1414, %v80
  %v1459 = vmul.f32 %v1417, %v81
  %v1460 = vmul.f32 %v1407, %v82
  %v1461 = vmul.f32 %v1409, %v83
  %v1462 = vmul.f32 %v1412, %v84
  %v1463 = vmul.f32 %v1414, %v85
  %v1464 = vmul.f32 %v1417, %v86
  %v1465 = vmul.f32 %v1407, %v87
  %v1466 = vmul.f32 %v1409, %v88
  %v1467 = vmul.f32 %v1412, %v89
  %v1468 = vmul.f32 %v1414, %v90
  %v1469 = vmul.f32 %v1417, %v91
  %v1470 = vpack.c.bf16 %v1451, %v1450
  %v1471 = vpack.c.bf16 %v1453, %v1452
  %v1472 = vpack.c.bf16 %v1455, %v1454
  %v1473 = vpack.c.bf16 %v1457, %v1456
  %v1474 = vpack.c.bf16 %v1459, %v1458
  %v1475 = vpack.c.bf16 %v1461, %v1460
  %v1476 = vpack.c.bf16 %v1463, %v1462
  %v1477 = vpack.c.bf16 %v1465, %v1464
  %v1478 = vpack.c.bf16 %v1467, %v1466
  %v1479 = vpack.c.bf16 %v1469, %v1468
  %v1480 = vpack.c.bf16 %v1363, %v1361
  %v1481 = vpack.c.bf16 %v1368, %v1366
  %v1482 = vpack.c.bf16 %v1371, %v1371
  %v1484 = vsel %vm184, %v1480, 0
  %v1487 = vsel %vm184, %v1481, 0
  %v1490 = vsel %vm184, %v1482, 0
  %v1493 = vsel %vm184, %v1440, 0
  %v1496 = vsel %vm184, %v1441, 0
  %v1499 = vsel %vm184, %v1442, 0
  %v1502 = vsel %vm184, %v1443, 0
  %v1505 = vsel %vm184, %v1444, 0
  %v1508 = vsel %vm184, %v1445, 0
  %v1511 = vsel %vm184, %v1446, 0
  %v1514 = vsel %vm184, %v1447, 0
  %v1517 = vsel %vm184, %v1448, 0
  %v1520 = vsel %vm184, %v1449, 0
  %1522 = vmatpush.bf16.xpose.msra.mxu0 %v1514
  %1523 = vmatpush.bf16.xpose.msra.mxu0 %v1511
  %1524 = vmatpush.bf16.xpose.msra.mxu0 %v1508
  %1525 = vmatpush.bf16.xpose.msra.mxu0 %v1505
  %1526 = vmatpush.bf16.xpose.msra.mxu0 %v1502
  %1527 = vmatpush.bf16.xpose.msra.mxu0 %v1499
  %1528 = vmatpush.bf16.xpose.msra.mxu0 %v1496
  %1529 = vmatpush.bf16.xpose.msra.mxu0 %v1493
  %1530 = vmatmul.bf16.gmra.mxu0 %v1484
  %v1531 = vpop.f32.mrf.mxu0
  %v1532 = vadd.f32 %v102, %v1531
  %v1533 = vpop.f32.mrf.mxu0
  %v1534 = vadd.f32 %v104, %v1533
  %1535 = vmatmul.bf16.gmra.mxu0 %v1487
  %v1536 = vpop.f32.mrf.mxu0
  %v1537 = vadd.f32 %v106, %v1536
  %v1538 = vpop.f32.mrf.mxu0
  %v1539 = vadd.f32 %v108, %v1538
  %1540 = vmatmul.bf16.gmra.mxu0 %v1490
  %v1541 = vpop.f32.mrf.mxu0
  %v1542 = vadd.f32 %v110, %v1541
  %v1543 = vpop.f32.mrf.mxu0
  %1544 = vdwg.mxu0
  %1545 = vmatpush.bf16.xpose.msra.mxu0 0
  %1546 = vmatpush.bf16.xpose.msra.mxu0 0
  %1547 = vmatpush.bf16.xpose.msra.mxu0 0
  %1548 = vmatpush.bf16.xpose.msra.mxu0 0
  %1549 = vmatpush.bf16.xpose.msra.mxu0 0
  %1550 = vmatpush.bf16.xpose.msra.mxu0 0
  %1551 = vmatpush.bf16.xpose.msra.mxu0 %v1520
  %1552 = vmatpush.bf16.xpose.msra.mxu0 %v1517
  %1553 = vmatmul.bf16.gmra.mxu0 %v1484
  %v1554 = vpop.f32.mrf.mxu0
  %v1555 = vadd.f32 %v103, %v1554
  %v1556 = vpop.f32.mrf.mxu0
  %v1557 = vadd.f32 %v105, %v1556
  %1558 = vmatmul.bf16.gmra.mxu0 %v1487
  %v1559 = vpop.f32.mrf.mxu0
  %v1560 = vadd.f32 %v107, %v1559
  %v1561 = vpop.f32.mrf.mxu0
  %v1562 = vadd.f32 %v109, %v1561
  %1563 = vmatmul.bf16.gmra.mxu0 %v1490
  %v1564 = vpop.f32.mrf.mxu0
  %v1565 = vadd.f32 %v111, %v1564
  %v1566 = vpop.f32.mrf.mxu0
  %1567 = vdwg.mxu0
  %v1568 = vsel %vm184, %v1555, -inf
  %v1569 = vmax.f32 %v1532, %v1568
  %1570 = vmax.xlane.f32.xlu0 %v1569
  %v1571 = vpop.xlane.xlu0 %1570
  %v1572 = vsel %vm184, %v1557, -inf
  %v1573 = vmax.f32 %v1534, %v1572
  %1574 = vmax.xlane.f32.xlu0 %v1573
  %v1575 = vpop.xlane.xlu0 %1574
  %v1576 = vsel %vm184, %v1560, -inf
  %v1577 = vmax.f32 %v1537, %v1576
  %1578 = vmax.xlane.f32.xlu0 %v1577
  %v1579 = vpop.xlane.xlu0 %1578
  %v1580 = vsel %vm184, %v1562, -inf
  %v1581 = vmax.f32 %v1539, %v1580
  %1582 = vmax.xlane.f32.xlu0 %v1581
  %v1583 = vpop.xlane.xlu0 %1582
  %v1584 = vsel %vm184, %v1565, -inf
  %v1585 = vmax.f32 %v1542, %v1584
  %1586 = vmax.xlane.f32.xlu0 %v1585
  %v1587 = vpop.xlane.xlu0 %1586
  %v1588 = vsub.f32 %v1532, %v1571
  %v1589 = vsub.f32 %v1555, %v1571
  %v1590 = vsub.f32 %v1534, %v1575
  %v1591 = vsub.f32 %v1557, %v1575
  %v1592 = vsub.f32 %v1537, %v1579
  %v1593 = vsub.f32 %v1560, %v1579
  %v1594 = vsub.f32 %v1539, %v1583
  %v1595 = vsub.f32 %v1562, %v1583
  %v1596 = vsub.f32 %v1542, %v1587
  %v1597 = vsub.f32 %v1565, %v1587
  %v1598 = vmul.f32 %v1588, 1.442695
  %v1599 = vpow.pop %v1598
  %v1600 = vmul.f32 %v1589, 1.442695
  %v1601 = vpow.pop %v1600
  %v1602 = vmul.f32 %v1590, 1.442695
  %v1603 = vpow.pop %v1602
  %v1604 = vmul.f32 %v1591, 1.442695
  %v1605 = vpow.pop %v1604
  %v1606 = vmul.f32 %v1592, 1.442695
  %v1607 = vpow.pop %v1606
  %v1608 = vmul.f32 %v1593, 1.442695
  %v1609 = vpow.pop %v1608
  %v1610 = vmul.f32 %v1594, 1.442695
  %v1611 = vpow.pop %v1610
  %v1612 = vmul.f32 %v1595, 1.442695
  %v1613 = vpow.pop %v1612
  %v1614 = vmul.f32 %v1596, 1.442695
  %v1615 = vpow.pop %v1614
  %v1616 = vmul.f32 %v1597, 1.442695
  %v1617 = vpow.pop %v1616
  %v1618 = vpack.c.bf16 %v1603, %v1599
  %v1619 = vpack.c.bf16 %v1605, %v1601
  %v1620 = vpack.c.bf16 %v1611, %v1607
  %v1621 = vpack.c.bf16 %v1613, %v1609
  %v1622 = vpack.c.bf16 %v1615, %v1615
  %v1623 = vpack.c.bf16 %v1617, %v1617
  %v1625 = vsel %vm184, %v1619, 0
  %v1628 = vsel %vm184, %v1621, 0
  %v1631 = vsel %vm184, %v1623, 0
  %1633 = vmatpush.bf16.msra.mxu0 %v99
  %1634 = vmatpush.bf16.msra.mxu0 %v98
  %1635 = vmatpush.bf16.msra.mxu0 %v97
  %1636 = vmatpush.bf16.msra.mxu0 %v96
  %1637 = vmatpush.bf16.msra.mxu0 %v95
  %1638 = vmatpush.bf16.msra.mxu0 %v94
  %1639 = vmatpush.bf16.msra.mxu0 %v93
  %1640 = vmatpush.bf16.msra.mxu0 %v92
  %1641 = vmatmul.bf16.gmra.mxu0 %v1618
  %v1642 = vpop.f32.mrf.mxu0
  %v1643 = vadd.f32 0.0, %v1642
  %v1644 = vpop.f32.mrf.mxu0
  %v1645 = vadd.f32 0.0, %v1644
  %1646 = vmatmul.bf16.gmra.mxu0 %v1620
  %v1647 = vpop.f32.mrf.mxu0
  %v1648 = vadd.f32 0.0, %v1647
  %v1649 = vpop.f32.mrf.mxu0
  %v1650 = vadd.f32 0.0, %v1649
  %1651 = vmatmul.bf16.gmra.mxu0 %v1622
  %v1652 = vpop.f32.mrf.mxu0
  %v1653 = vadd.f32 0.0, %v1652
  %v1654 = vpop.f32.mrf.mxu0
  %1655 = vdwg.mxu0
  %1656 = vmatpush.bf16.msra.mxu0 0
  %1657 = vmatpush.bf16.msra.mxu0 0
  %1658 = vmatpush.bf16.msra.mxu0 0
  %1659 = vmatpush.bf16.msra.mxu0 0
  %1660 = vmatpush.bf16.msra.mxu0 0
  %1661 = vmatpush.bf16.msra.mxu0 0
  %1662 = vmatpush.bf16.msra.mxu0 %v101
  %1663 = vmatpush.bf16.msra.mxu0 %v100
  %1664 = vmatmul.bf16.gmra.mxu0 %v1625
  %v1665 = vpop.f32.mrf.mxu0
  %v1666 = vadd.f32 %v1643, %v1665
  %v1667 = vpop.f32.mrf.mxu0
  %v1668 = vadd.f32 %v1645, %v1667
  %1669 = vmatmul.bf16.gmra.mxu0 %v1628
  %v1670 = vpop.f32.mrf.mxu0
  %v1671 = vadd.f32 %v1648, %v1670
  %v1672 = vpop.f32.mrf.mxu0
  %v1673 = vadd.f32 %v1650, %v1672
  %1674 = vmatmul.bf16.gmra.mxu0 %v1631
  %v1675 = vpop.f32.mrf.mxu0
  %v1676 = vadd.f32 %v1653, %v1675
  %v1677 = vpop.f32.mrf.mxu0
  %1678 = vdwg.mxu0
  %1679 = vmatpush.bf16.msra.mxu0 %v1477
  %1680 = vmatpush.bf16.msra.mxu0 %v1476
  %1681 = vmatpush.bf16.msra.mxu0 %v1475
  %1682 = vmatpush.bf16.msra.mxu0 %v1474
  %1683 = vmatpush.bf16.msra.mxu0 %v1473
  %1684 = vmatpush.bf16.msra.mxu0 %v1472
  %1685 = vmatpush.bf16.msra.mxu0 %v1471
  %1686 = vmatpush.bf16.msra.mxu0 %v1470
  %1687 = vmatmul.bf16.gmra.mxu0 %v1618
  %v1688 = vpop.f32.mrf.mxu0
  %v1689 = vadd.f32 0.0, %v1688
  %v1690 = vpop.f32.mrf.mxu0
  %v1691 = vadd.f32 0.0, %v1690
  %1692 = vmatmul.bf16.gmra.mxu0 %v1620
  %v1693 = vpop.f32.mrf.mxu0
  %v1694 = vadd.f32 0.0, %v1693
  %v1695 = vpop.f32.mrf.mxu0
  %v1696 = vadd.f32 0.0, %v1695
  %1697 = vmatmul.bf16.gmra.mxu0 %v1622
  %v1698 = vpop.f32.mrf.mxu0
  %v1699 = vadd.f32 0.0, %v1698
  %v1700 = vpop.f32.mrf.mxu0
  %1701 = vdwg.mxu0
  %1702 = vmatpush.bf16.msra.mxu0 0
  %1703 = vmatpush.bf16.msra.mxu0 0
  %1704 = vmatpush.bf16.msra.mxu0 0
  %1705 = vmatpush.bf16.msra.mxu0 0
  %1706 = vmatpush.bf16.msra.mxu0 0
  %1707 = vmatpush.bf16.msra.mxu0 0
  %1708 = vmatpush.bf16.msra.mxu0 %v1479
  %1709 = vmatpush.bf16.msra.mxu0 %v1478
  %1710 = vmatmul.bf16.gmra.mxu0 %v1625
  %v1711 = vpop.f32.mrf.mxu0
  %v1712 = vadd.f32 %v1689, %v1711
  %v1713 = vpop.f32.mrf.mxu0
  %v1714 = vadd.f32 %v1691, %v1713
  %1715 = vmatmul.bf16.gmra.mxu0 %v1628
  %v1716 = vpop.f32.mrf.mxu0
  %v1717 = vadd.f32 %v1694, %v1716
  %v1718 = vpop.f32.mrf.mxu0
  %v1719 = vadd.f32 %v1696, %v1718
  %1720 = vmatmul.bf16.gmra.mxu0 %v1631
  %v1721 = vpop.f32.mrf.mxu0
  %v1722 = vadd.f32 %v1699, %v1721
  %v1723 = vpop.f32.mrf.mxu0
  %1724 = vdwg.mxu0
  %v1725 = vrcp.pop %v1666
  %v1726 = vrcp.pop %v1668
  %v1727 = vrcp.pop %v1671
  %v1728 = vrcp.pop %v1673
  %v1729 = vrcp.pop %v1676
  %v1730 = vmul.f32 %v1712, %v1725
  %v1731 = vmul.f32 %v1714, %v1726
  %v1732 = vmul.f32 %v1717, %v1727
  %v1733 = vmul.f32 %v1719, %v1728
  %v1734 = vmul.f32 %v1722, %v1729
  %s1735 = scalar_lea.vmem %s10, 16
  %v1736 = vld [vmem:[%s1735] sm:$0xf]
  %v1737 = vld [vmem:[%s1735 + $0x4] sm:$0xf]
  %v1738 = vld [vmem:[%s1735 + $0x8] sm:$0xf]
  %v1739 = vld [vmem:[%s1735 + $0xc] sm:$0xf]
  %v1740 = vpack.c.bf16 %v1731, %v1730
  %v1741 = vpack.c.bf16 %v1733, %v1732
  %v1742 = vpack.c.bf16 %v1734, %v1734
  %v1747 = vunpack.c.l.b16 %v1736
  %v1748 = vunpack.c.l.b16 %v1737
  %v1749 = vunpack.c.l.b16 %v1738
  %v1750 = vunpack.c.l.b16 %v1739
  %v1751 = vpack.c.b16 %v1748, %v1747
  %v1752 = vpack.c.b16 %v1750, %v1749
  %v1756 = vsel %vm184, %v1740, 0
  %v1759 = vsel %vm184, %v1741, 0
  %v1762 = vsel %vm184, %v1742, 0
  %1764 = vmatpush.bf16.msra.mxu0 0
  %1765 = vmatpush.bf16.msra.mxu0 0
  %1766 = vmatpush.bf16.msra.mxu0 0
  %1767 = vmatpush.bf16.msra.mxu0 0
  %1768 = vmatpush.bf16.msra.mxu0 0
  %1769 = vmatpush.bf16.msra.mxu0 0
  %1770 = vmatpush.bf16.msra.mxu0 %v1752
  %1771 = vmatpush.bf16.msra.mxu0 %v1751
  %1772 = vmatmul.bf16.gmra.mxu0 %v1756
  %v1773 = vpop.f32.mrf.mxu0
  %v1774 = vadd.f32 0.0, %v1773
  %v1775 = vpop.f32.mrf.mxu0
  %v1776 = vadd.f32 0.0, %v1775
  %1777 = vmatmul.bf16.gmra.mxu0 %v1759
  %v1778 = vpop.f32.mrf.mxu0
  %v1779 = vadd.f32 0.0, %v1778
  %v1780 = vpop.f32.mrf.mxu0
  %v1781 = vadd.f32 0.0, %v1780
  %1782 = vmatmul.bf16.gmra.mxu0 %v1762
  %v1783 = vpop.f32.mrf.mxu0
  %v1784 = vadd.f32 0.0, %v1783
  %v1785 = vpop.f32.mrf.mxu0
  %1786 = vdwg.mxu0
  %v1787 = vadd.f32 %v1154, %v1774
  %v1788 = vadd.f32 %v1155, %v1776
  %v1789 = vadd.f32 %v1156, %v1779
  %v1790 = vadd.f32 %v1157, %v1781
  %v1791 = vadd.f32 %v1158, %v1784
  %s1792 = scalar_lea.vmem %s11, 1
  %v1793 = vld [vmem:[%s1792] sm:$0x1]
  %v1795 = vperm.slane %v1793, 0
  %v1797 = vadd.f32 %v1787, %v1795
  %v1798 = vadd.f32 %v1788, %v1795
  %v1799 = vadd.f32 %v1789, %v1795
  %v1800 = vadd.f32 %v1790, %v1795
  %v1801 = vadd.f32 %v1791, %v1795
  %s1802 = scalar_lea.vmem %s12, 1
  %v1803 = vld [vmem:[%s1802] sm:$0x1]
  %s1804 = scalar_lea.vmem %s13, 1
  %v1805 = vld [vmem:[%s1804] sm:$0x1]
  %v1806 = vsel %vm184, %v1797, 0.0
  %1807 = vadd.xlane.f32.xlu0 %v1806
  %v1808 = vpop.xlane.xlu0 %1807
  %v1809 = vsel %vm184, %v1798, 0.0
  %1810 = vadd.xlane.f32.xlu0 %v1809
  %v1811 = vpop.xlane.xlu0 %1810
  %v1812 = vsel %vm184, %v1799, 0.0
  %1813 = vadd.xlane.f32.xlu0 %v1812
  %v1814 = vpop.xlane.xlu0 %1813
  %v1815 = vsel %vm184, %v1800, 0.0
  %1816 = vadd.xlane.f32.xlu0 %v1815
  %v1817 = vpop.xlane.xlu0 %1816
  %v1818 = vsel %vm184, %v1801, 0.0
  %1819 = vadd.xlane.f32.xlu0 %v1818
  %v1820 = vpop.xlane.xlu0 %1819
  %v1821 = vmul.f32 %v1808, %v206
  %v1822 = vmul.f32 %v1811, %v206
  %v1823 = vmul.f32 %v1814, %v206
  %v1824 = vmul.f32 %v1817, %v206
  %v1825 = vmul.f32 %v1820, %v206
  %v1826 = vsub.f32 %v1797, %v1821
  %v1827 = vsub.f32 %v1798, %v1822
  %v1828 = vsub.f32 %v1799, %v1823
  %v1829 = vsub.f32 %v1800, %v1824
  %v1830 = vsub.f32 %v1801, %v1825
  %v1831 = vmul.f32 %v1826, %v1826
  %v1832 = vmul.f32 %v1827, %v1827
  %v1833 = vmul.f32 %v1828, %v1828
  %v1834 = vmul.f32 %v1829, %v1829
  %v1835 = vmul.f32 %v1830, %v1830
  %v1836 = vsel %vm184, %v1831, 0.0
  %1837 = vadd.xlane.f32.xlu0 %v1836
  %v1838 = vpop.xlane.xlu0 %1837
  %v1839 = vsel %vm184, %v1832, 0.0
  %1840 = vadd.xlane.f32.xlu0 %v1839
  %v1841 = vpop.xlane.xlu0 %1840
  %v1842 = vsel %vm184, %v1833, 0.0
  %1843 = vadd.xlane.f32.xlu0 %v1842
  %v1844 = vpop.xlane.xlu0 %1843
  %v1845 = vsel %vm184, %v1834, 0.0
  %1846 = vadd.xlane.f32.xlu0 %v1845
  %v1847 = vpop.xlane.xlu0 %1846
  %v1848 = vsel %vm184, %v1835, 0.0
  %1849 = vadd.xlane.f32.xlu0 %v1848
  %v1850 = vpop.xlane.xlu0 %1849
  %v1851 = vmul.f32 %v1838, %v206
  %v1852 = vmul.f32 %v1841, %v206
  %v1853 = vmul.f32 %v1844, %v206
  %v1854 = vmul.f32 %v1847, %v206
  %v1855 = vmul.f32 %v1850, %v206
  %v1856 = vadd.f32 %v1851, 1e-06
  %v1857 = vadd.f32 %v1852, 1e-06
  %v1858 = vadd.f32 %v1853, 1e-06
  %v1859 = vadd.f32 %v1854, 1e-06
  %v1860 = vadd.f32 %v1855, 1e-06
  %v1861 = vrsqrt.pop %v1856
  %v1862 = vmul.f32 %v1861, %v1856
  %v1863 = vmul.f32 %v1862, %v1861
  %v1864 = vmul.f32 0.5, %v1863
  %v1865 = vsub.f32 1.5, %v1864
  %v1866 = vmul.f32 %v1861, %v1865
  %vm1867 = vweird.f32 %v1856
  %vm1868 = vweird.f32 %v1861
  %vm1869 = vmor %vm1867, %vm1868
  %v1870 = vsel %vm1869, %v1861, %v1866
  %v1871 = vrsqrt.pop %v1857
  %v1872 = vmul.f32 %v1871, %v1857
  %v1873 = vmul.f32 %v1872, %v1871
  %v1874 = vmul.f32 0.5, %v1873
  %v1875 = vsub.f32 1.5, %v1874
  %v1876 = vmul.f32 %v1871, %v1875
  %vm1877 = vweird.f32 %v1857
  %vm1878 = vweird.f32 %v1871
  %vm1879 = vmor %vm1877, %vm1878
  %v1880 = vsel %vm1879, %v1871, %v1876
  %v1881 = vrsqrt.pop %v1858
  %v1882 = vmul.f32 %v1881, %v1858
  %v1883 = vmul.f32 %v1882, %v1881
  %v1884 = vmul.f32 0.5, %v1883
  %v1885 = vsub.f32 1.5, %v1884
  %v1886 = vmul.f32 %v1881, %v1885
  %vm1887 = vweird.f32 %v1858
  %vm1888 = vweird.f32 %v1881
  %vm1889 = vmor %vm1887, %vm1888
  %v1890 = vsel %vm1889, %v1881, %v1886
  %v1891 = vrsqrt.pop %v1859
  %v1892 = vmul.f32 %v1891, %v1859
  %v1893 = vmul.f32 %v1892, %v1891
  %v1894 = vmul.f32 0.5, %v1893
  %v1895 = vsub.f32 1.5, %v1894
  %v1896 = vmul.f32 %v1891, %v1895
  %vm1897 = vweird.f32 %v1859
  %vm1898 = vweird.f32 %v1891
  %vm1899 = vmor %vm1897, %vm1898
  %v1900 = vsel %vm1899, %v1891, %v1896
  %v1901 = vrsqrt.pop %v1860
  %v1902 = vmul.f32 %v1901, %v1860
  %v1903 = vmul.f32 %v1902, %v1901
  %v1904 = vmul.f32 0.5, %v1903
  %v1905 = vsub.f32 1.5, %v1904
  %v1906 = vmul.f32 %v1901, %v1905
  %vm1907 = vweird.f32 %v1860
  %vm1908 = vweird.f32 %v1901
  %vm1909 = vmor %vm1907, %vm1908
  %v1910 = vsel %vm1909, %v1901, %v1906
  %v1911 = vmul.f32 %v1826, %v1870
  %v1912 = vmul.f32 %v1827, %v1880
  %v1913 = vmul.f32 %v1828, %v1890
  %v1914 = vmul.f32 %v1829, %v1900
  %v1915 = vmul.f32 %v1830, %v1910
  %v1917 = vperm.slane %v1803, 0
  %v1919 = vmul.f32 %v1911, %v1917
  %v1920 = vmul.f32 %v1912, %v1917
  %v1921 = vmul.f32 %v1913, %v1917
  %v1922 = vmul.f32 %v1914, %v1917
  %v1923 = vmul.f32 %v1915, %v1917
  %v1925 = vperm.slane %v1805, 0
  %v1927 = vadd.f32 %v1919, %v1925
  %v1928 = vadd.f32 %v1920, %v1925
  %v1929 = vadd.f32 %v1921, %v1925
  %v1930 = vadd.f32 %v1922, %v1925
  %v1931 = vadd.f32 %v1923, %v1925
  %s1932 = scalar_lea.vmem %s14, 16
  %v1933 = vld [vmem:[%s1932] sm:$0xf]
  %v1934 = vld [vmem:[%s1932 + $0x4] sm:$0xf]
  %v1935 = vld [vmem:[%s1932 + $0x8] sm:$0xf]
  %v1936 = vld [vmem:[%s1932 + $0xc] sm:$0xf]
  %v1937 = vpack.c.bf16 %v1928, %v1927
  %v1938 = vpack.c.bf16 %v1930, %v1929
  %v1939 = vpack.c.bf16 %v1931, %v1931
  %s1940 = scalar_lea.vmem %s15, 1
  %v1941 = vld [vmem:[%s1940] sm:$0x1]
  %v1943 = vperm.slane %v1941, 0
  %v1949 = vunpack.c.l.b16 %v1933
  %v1950 = vunpack.c.l.b16 %v1934
  %v1951 = vunpack.c.l.b16 %v1935
  %v1952 = vunpack.c.l.b16 %v1936
  %v1953 = vpack.c.b16 %v1950, %v1949
  %v1954 = vpack.c.b16 %v1952, %v1951
  %v1958 = vsel %vm184, %v1937, 0
  %v1961 = vsel %vm184, %v1938, 0
  %v1964 = vsel %vm184, %v1939, 0
  %1966 = vmatpush.bf16.msra.mxu0 0
  %1967 = vmatpush.bf16.msra.mxu0 0
  %1968 = vmatpush.bf16.msra.mxu0 0
  %1969 = vmatpush.bf16.msra.mxu0 0
  %1970 = vmatpush.bf16.msra.mxu0 0
  %1971 = vmatpush.bf16.msra.mxu0 0
  %1972 = vmatpush.bf16.msra.mxu0 %v1954
  %1973 = vmatpush.bf16.msra.mxu0 %v1953
  %1974 = vmatmul.bf16.gmra.mxu0 %v1958
  %v1975 = vpop.f32.mrf.mxu0
  %v1976 = vadd.f32 %v1943, %v1975
  %v1977 = vpop.f32.mrf.mxu0
  %v1978 = vadd.f32 %v1943, %v1977
  %1979 = vmatmul.bf16.gmra.mxu0 %v1961
  %v1980 = vpop.f32.mrf.mxu0
  %v1981 = vadd.f32 %v1943, %v1980
  %v1982 = vpop.f32.mrf.mxu0
  %v1983 = vadd.f32 %v1943, %v1982
  %1984 = vmatmul.bf16.gmra.mxu0 %v1964
  %v1985 = vpop.f32.mrf.mxu0
  %v1986 = vadd.f32 %v1943, %v1985
  %v1987 = vpop.f32.mrf.mxu0
  %1988 = vdwg.mxu0
  %v1989 = vmul.f32 %v1976, 0.5
  %v1990 = vmul.f32 %v1978, 0.5
  %v1991 = vmul.f32 %v1981, 0.5
  %v1992 = vmul.f32 %v1983, 0.5
  %v1993 = vmul.f32 %v1986, 0.5
  %v1994 = vmul.f32 %v1976, 0.044715
  %v1995 = vmul.f32 %v1978, 0.044715
  %v1996 = vmul.f32 %v1981, 0.044715
  %v1997 = vmul.f32 %v1983, 0.044715
  %v1998 = vmul.f32 %v1986, 0.044715
  %v1999 = vmul.f32 %v1994, %v1976
  %v2000 = vmul.f32 %v1995, %v1978
  %v2001 = vmul.f32 %v1996, %v1981
  %v2002 = vmul.f32 %v1997, %v1983
  %v2003 = vmul.f32 %v1998, %v1986
  %v2004 = vmul.f32 %v1999, %v1976
  %v2005 = vmul.f32 %v2000, %v1978
  %v2006 = vmul.f32 %v2001, %v1981
  %v2007 = vmul.f32 %v2002, %v1983
  %v2008 = vmul.f32 %v2003, %v1986
  %v2009 = vadd.f32 %v1976, %v2004
  %v2010 = vadd.f32 %v1978, %v2005
  %v2011 = vadd.f32 %v1981, %v2006
  %v2012 = vadd.f32 %v1983, %v2007
  %v2013 = vadd.f32 %v1986, %v2008
  %v2014 = vmul.f32 %v2009, 0.7978846
  %v2015 = vmul.f32 %v2010, 0.7978846
  %v2016 = vmul.f32 %v2011, 0.7978846
  %v2017 = vmul.f32 %v2012, 0.7978846
  %v2018 = vmul.f32 %v2013, 0.7978846
  %v2019 = vtanh.pop %v2014
  %v2020 = vtanh.pop %v2015
  %v2021 = vtanh.pop %v2016
  %v2022 = vtanh.pop %v2017
  %v2023 = vtanh.pop %v2018
  %v2024 = vadd.f32 %v2019, 1.0
  %v2025 = vadd.f32 %v2020, 1.0
  %v2026 = vadd.f32 %v2021, 1.0
  %v2027 = vadd.f32 %v2022, 1.0
  %v2028 = vadd.f32 %v2023, 1.0
  %v2029 = vmul.f32 %v1989, %v2024
  %v2030 = vmul.f32 %v1990, %v2025
  %v2031 = vmul.f32 %v1991, %v2026
  %v2032 = vmul.f32 %v1992, %v2027
  %v2033 = vmul.f32 %v1993, %v2028
  %s2034 = scalar_lea.vmem %s16, 64
  %v2035 = vld [vmem:[%s2034] sm:$0xf]
  %v2036 = vld [vmem:[%s2034 + $0x4] sm:$0xf]
  %v2037 = vld [vmem:[%s2034 + $0x8] sm:$0xf]
  %v2038 = vld [vmem:[%s2034 + $0xc] sm:$0xf]
  %v2039 = vld [vmem:[%s2034 + $0x10] sm:$0xf]
  %v2040 = vld [vmem:[%s2034 + $0x14] sm:$0xf]
  %v2041 = vld [vmem:[%s2034 + $0x18] sm:$0xf]
  %v2042 = vld [vmem:[%s2034 + $0x1c] sm:$0xf]
  %v2043 = vld [vmem:[%s2034 + $0x20] sm:$0xf]
  %v2044 = vld [vmem:[%s2034 + $0x24] sm:$0xf]
  %v2045 = vld [vmem:[%s2034 + $0x28] sm:$0xf]
  %v2046 = vld [vmem:[%s2034 + $0x2c] sm:$0xf]
  %v2047 = vld [vmem:[%s2034 + $0x30] sm:$0xf]
  %v2048 = vld [vmem:[%s2034 + $0x34] sm:$0xf]
  %v2049 = vld [vmem:[%s2034 + $0x38] sm:$0xf]
  %v2050 = vld [vmem:[%s2034 + $0x3c] sm:$0xf]
  %v2051 = vpack.c.bf16 %v2030, %v2029
  %v2052 = vpack.c.bf16 %v2032, %v2031
  %v2053 = vpack.c.bf16 %v2033, %v2033
  %v2070 = vunpack.c.l.b16 %v2035
  %v2071 = vunpack.c.l.b16 %v2036
  %v2072 = vunpack.c.l.b16 %v2037
  %v2073 = vunpack.c.l.b16 %v2038
  %v2074 = vunpack.c.l.b16 %v2039
  %v2075 = vunpack.c.l.b16 %v2040
  %v2076 = vunpack.c.l.b16 %v2041
  %v2077 = vunpack.c.l.b16 %v2042
  %v2078 = vunpack.c.l.b16 %v2043
  %v2079 = vunpack.c.l.b16 %v2044
  %v2080 = vunpack.c.l.b16 %v2045
  %v2081 = vunpack.c.l.b16 %v2046
  %v2082 = vunpack.c.l.b16 %v2047
  %v2083 = vunpack.c.l.b16 %v2048
  %v2084 = vunpack.c.l.b16 %v2049
  %v2085 = vunpack.c.l.b16 %v2050
  %v2086 = vpack.c.b16 %v2071, %v2070
  %v2087 = vpack.c.b16 %v2073, %v2072
  %v2088 = vpack.c.b16 %v2075, %v2074
  %v2089 = vpack.c.b16 %v2077, %v2076
  %v2090 = vpack.c.b16 %v2079, %v2078
  %v2091 = vpack.c.b16 %v2081, %v2080
  %v2092 = vpack.c.b16 %v2083, %v2082
  %v2093 = vpack.c.b16 %v2085, %v2084
  %2102 = vmatpush.bf16.msra.mxu0 %v2093
  %2103 = vmatpush.bf16.msra.mxu0 %v2092
  %2104 = vmatpush.bf16.msra.mxu0 %v2091
  %2105 = vmatpush.bf16.msra.mxu0 %v2090
  %2106 = vmatpush.bf16.msra.mxu0 %v2089
  %2107 = vmatpush.bf16.msra.mxu0 %v2088
  %2108 = vmatpush.bf16.msra.mxu0 %v2087
  %2109 = vmatpush.bf16.msra.mxu0 %v2086
  %2110 = vmatmul.bf16.gmra.mxu0 %v2051
  %v2111 = vpop.f32.mrf.mxu0
  %v2112 = vadd.f32 0.0, %v2111
  %v2113 = vpop.f32.mrf.mxu0
  %v2114 = vadd.f32 0.0, %v2113
  %2115 = vmatmul.bf16.gmra.mxu0 %v2052
  %v2116 = vpop.f32.mrf.mxu0
  %v2117 = vadd.f32 0.0, %v2116
  %v2118 = vpop.f32.mrf.mxu0
  %v2119 = vadd.f32 0.0, %v2118
  %2120 = vmatmul.bf16.gmra.mxu0 %v2053
  %v2121 = vpop.f32.mrf.mxu0
  %v2122 = vadd.f32 0.0, %v2121
  %v2123 = vpop.f32.mrf.mxu0
  %2124 = vdwg.mxu0
  %v2125 = vadd.f32 %v1797, %v2112
  %v2126 = vadd.f32 %v1798, %v2114
  %v2127 = vadd.f32 %v1799, %v2117
  %v2128 = vadd.f32 %v1800, %v2119
  %v2129 = vadd.f32 %v1801, %v2122
  %s2130 = scalar_lea.vmem %s17, 1
  %v2131 = vld [vmem:[%s2130] sm:$0x1]
  %v2133 = vperm.slane %v2131, 0
  %v2135 = vadd.f32 %v2125, %v2133
  %v2136 = vadd.f32 %v2126, %v2133
  %v2137 = vadd.f32 %v2127, %v2133
  %v2138 = vadd.f32 %v2128, %v2133
  %v2139 = vadd.f32 %v2129, %v2133
  %v2140 = vld [vmem:[%s4] sm:$0xff]
  %vm2141 = vcmask 326656
  %v2143 = vsel %vm2141, %v2140, 0
  %2145 = vmatpush.msra.mxu0 0.0
  %2146 = vmatpush.msra.mxu0 0.0
  %2147 = vmatpush.msra.mxu0 0.0
  %2148 = vmatpush.msra.mxu0 0.0
  %2149 = vmatpush.msra.mxu0 0.0
  %2150 = vmatpush.msra.mxu0 0.0
  %2151 = vmatpush.msra.mxu0 0.0
  %2152 = vmatpush.msra.mxu0 0.0
  %2153 = vmatpush.msra.mxu0 0.0
  %2154 = vmatpush.msra.mxu0 0.0
  %2155 = vmatpush.msra.mxu0 0.0
  %2156 = vmatpush.msra.mxu0 %v2139
  %2157 = vmatpush.msra.mxu0 %v2138
  %2158 = vmatpush.msra.mxu0 %v2137
  %2159 = vmatpush.msra.mxu0 %v2136
  %2160 = vmatpush.msra.mxu0 %v2135
  %2161 = vmatmul.f32.gmra.mxu0 %v2143
  %v2162 = vpop.f32.mrf.mxu0
  %v2163 = vadd.f32 0.0, %v2162
  %2164 = vdwg.mxu0
  %v2165 = vld [vmem:[%s18] sm:$0x1]
  %v2166 = vld [vmem:[%s19] sm:$0x1]
  %v2167 = vsel %vm184, %v2163, 0.0
  %2168 = vadd.xlane.f32.xlu0 %v2167
  %v2169 = vpop.xlane.xlu0 %2168
  %v2170 = vmul.f32 %v2169, %v206
  %v2171 = vsub.f32 %v2163, %v2170
  %v2172 = vmul.f32 %v2171, %v2171
  %v2173 = vsel %vm184, %v2172, 0.0
  %2174 = vadd.xlane.f32.xlu0 %v2173
  %v2175 = vpop.xlane.xlu0 %2174
  %v2176 = vmul.f32 %v2175, %v206
  %v2177 = vadd.f32 %v2176, 1e-06
  %v2178 = vrsqrt.pop %v2177
  %v2179 = vmul.f32 %v2178, %v2177
  %v2180 = vmul.f32 %v2179, %v2178
  %v2181 = vmul.f32 0.5, %v2180
  %v2182 = vsub.f32 1.5, %v2181
  %v2183 = vmul.f32 %v2178, %v2182
  %vm2184 = vweird.f32 %v2177
  %vm2185 = vweird.f32 %v2178
  %vm2186 = vmor %vm2184, %vm2185
  %v2187 = vsel %vm2186, %v2178, %v2183
  %v2188 = vmul.f32 %v2171, %v2187
  %v2190 = vperm.slane %v2165, 0
  %v2192 = vmul.f32 %v2188, %v2190
  %v2194 = vperm.slane %v2166, 0
  %v2196 = vadd.f32 %v2192, %v2194
  %v2197 = vld [vmem:[%s20] sm:$0xf]
  %v2198 = vld [vmem:[%s20 + $0x4] sm:$0xf]
  %v2199 = vld [vmem:[%s20 + $0x8] sm:$0xf]
  %v2200 = vld [vmem:[%s20 + $0xc] sm:$0xf]
  %v2201 = vpack.c.bf16 %v2196, %v2196
  %v2202 = vld [vmem:[%s21] sm:$0x1]
  %v2204 = vperm.slane %v2202, 0
  %v2210 = vunpack.c.l.b16 %v2197
  %v2211 = vunpack.c.l.b16 %v2198
  %v2212 = vunpack.c.l.b16 %v2199
  %v2213 = vunpack.c.l.b16 %v2200
  %v2214 = vpack.c.b16 %v2211, %v2210
  %v2215 = vpack.c.b16 %v2213, %v2212
  %v2219 = vsel %vm184, %v2201, 0
  %2221 = vmatpush.bf16.msra.mxu0 0
  %2222 = vmatpush.bf16.msra.mxu0 0
  %2223 = vmatpush.bf16.msra.mxu0 0
  %2224 = vmatpush.bf16.msra.mxu0 0
  %2225 = vmatpush.bf16.msra.mxu0 0
  %2226 = vmatpush.bf16.msra.mxu0 0
  %2227 = vmatpush.bf16.msra.mxu0 %v2215
  %2228 = vmatpush.bf16.msra.mxu0 %v2214
  %2229 = vmatmul.bf16.gmra.mxu0 %v2219
  %v2230 = vpop.f32.mrf.mxu0
  %v2231 = vadd.f32 %v2204, %v2230
  %v2232 = vpop.f32.mrf.mxu0
  %2233 = vdwg.mxu0
  %2234 = vst [vmem:[%s22] sm:$0xff] %v2231
  // Predicated region
  $region90: #{deit_forward.1} parent=0 // pred_check
    _
  $region91: #{deit_forward.1} parent=0 // pred_check_branch
    %2236 = sbr.rel (0) target = $region93
  $region92: #{deit_forward.1} parent=0 // pred_region
    _
  $region93: #{deit_forward.1} parent=0 // pred_fallthru
    _
  // Predicated region
  $region94: #{deit_forward.1} parent=0 // pred_check
    _
  $region95: #{deit_forward.1} parent=0 // pred_check_branch
    %2238 = sbr.rel (0) target = $region97
  $region96: #{deit_forward.1} parent=0 // pred_region
    _
  $region97: #{deit_forward.1} parent=0 // pred_fallthru
    _

</llo_original>
